<compile_context>
chip_gen: v7x
topology: tpu7x:2x2x1
jax: 0.10.0
libtpu: 0.0.40
codegen_flags: <defaults>
</compile_context>

<pallas_src>
import jax
import jax.numpy as jnp
from jax.experimental import pallas as pl
from jax.experimental.pallas import tpu as pltpu


# ---------------------------------------------------------------------------
# Single fused kernel: input layer + recurrence + output projection.
# ---------------------------------------------------------------------------
def _fused_caption_kernel(cnn_ref, embh_ref, h0_ref,
                          w_in_ref, b_in_ref,
                          w_p_ref, w_h_ref, b_rnn_ref,
                          w_out_ref, b_out_ref,
                          logits_ref, hout_ref,
                          h_all):
    B = cnn_ref.shape[0]
    TB = embh_ref.shape[0]
    T = TB // B
    Vp = w_out_ref.shape[1]
    cdt = w_in_ref.dtype            # MXU operand dtype (bf16 fast path or f32)

    # ---- input layer: Dropout(eval)=identity -> Linear -> LeakyReLU(0.01) ----
    # TODO(synk): training-mode Dropout(p=0.25) would need a pltpu.prng_seed /
    # prng_random_bits Bernoulli mask on `processed`; eval-mode identity implemented.
    x = jnp.dot(cnn_ref[...].astype(cdt), w_in_ref[...],
                preferred_element_type=jnp.float32) + b_in_ref[...]
    processed = jnp.where(x > 0.0, x, 0.01 * x)                     # [B, M], f32

    # ---- time-invariant contribution, RNN bias folded in: [B, H_pad] ----
    base = jnp.dot(processed.astype(cdt), w_p_ref[...],
                   preferred_element_type=jnp.float32) + b_rnn_ref[...]

    # ---- recurrence: only the tiny [B,H_pad]@[H_pad,H_pad] update stays serial ----
    # TODO(synk): at captioning-scale T (20-40) switch to lax.fori_loop with
    # pl.ds(pl.multiple_of(t*B, 8), B) indexing and hold w_h in the MXU staging
    # registers (pltpu.matmul_push_rhs) instead of re-pushing it every step.
    w_h = w_h_ref[...]
    h = h0_ref[...]                                                 # [B, H_pad], f32
    for t in range(T):              # T small & static -> unrolled at trace time
        pre = (base
               + embh_ref[t * B:(t + 1) * B, :]
               + jnp.dot(h.astype(cdt), w_h, preferred_element_type=jnp.float32))
        h = jnp.tanh(pre)
        h_all[t * B:(t + 1) * B, :] = h

    # ---- one lane-dense output projection for all steps: (TB,H_pad)@(H_pad,V_pad) ----
    # TODO(synk): at production sizes (V ~ 10k) tile this over (TB, V) with a real grid,
    # mark the row axis "parallel" for v7x's two TensorCores and set vmem_limit_bytes.
    logits_all = jnp.dot(h_all[...].astype(cdt), w_out_ref[...],
                         preferred_element_type=jnp.float32) + b_out_ref[...]

    # Scatter the time-major rows into a batch-major (B, T*V_pad) slab so the wrapper
    # needs only a free reshape (no HBM transpose of the logits tensor).
    for t in range(T):
        logits_ref[:, t * Vp:(t + 1) * Vp] = logits_all[t * B:(t + 1) * B, :]

    hout_ref[...] = h


def caption_forward_fused(cnn_features, emb_contrib, h0,
                          w_in, b_in, w_p, w_h, b_rnn, w_out, b_out):
    B = cnn_features.shape[0]
    TB, H_pad = emb_contrib.shape
    T = TB // B
    V_pad = w_out.shape[1]

    vmem = pl.BlockSpec(memory_space=pltpu.MemorySpace.VMEM)
    logits_bm, h_final = pl.pallas_call(
        _fused_caption_kernel,
        out_shape=(
            jax.ShapeDtypeStruct((B, T * V_pad), jnp.float32),   # batch-major logits slab
            jax.ShapeDtypeStruct((B, H_pad), jnp.float32),       # final hidden state
        ),
        # Un-gridded single invocation: whole arrays resident in VMEM, no pipeline
        # double-buffering of the (largest) weight inputs.
        in_specs=[vmem] * 10,
        out_specs=(vmem, vmem),
        scratch_shapes=[pltpu.VMEM((TB, H_pad), jnp.float32)],   # all hidden states h_1..h_T
    )(cnn_features, emb_contrib, h0, w_in, b_in, w_p, w_h, b_rnn, w_out, b_out)
    return logits_bm, h_final


# ---------------------------------------------------------------------------
# Full model wrapper (glue in plain JAX: lane-padding, weight split, embedding
# contribution table + time-major gather).
# ---------------------------------------------------------------------------
def _round_up(n, m):
    return ((n + m - 1) // m) * m


def image_caption_model_forward(params, cnn_features, x_tokens,
                                is_train=True, current_hidden_state=None,
                                use_bf16=True):
    # TODO(synk): is_train=False greedy-decode path (argmax fed back through the
    # embedding for 40 steps) is not implemented; only the training-mode forward is.
    B = cnn_features.shape[0]
    T = x_tokens.shape[1]
    M = params["w_in"].shape[1]
    E = params["embedding"].shape[1]
    H = params["w_rnn"].shape[1]
    V = params["w_out"].shape[1]
    H_pad = _round_up(H, 128)
    V_pad = _round_up(V, 128)
    cdt = jnp.bfloat16 if use_bf16 else jnp.float32
    hp = jax.lax.Precision.HIGHEST

    # Static split of the RNN weight into its three row blocks (no in-kernel concat),
    # zero-padded to lane width.  Exact: padded rows/cols contribute 0 and tanh(0)=0.
    w_rnn = params["w_rnn"]
    w_p = jnp.pad(w_rnn[:M, :], ((0, 0), (0, H_pad - H)))               # [M, H_pad]
    w_e = jnp.pad(w_rnn[M:M + E, :], ((0, 0), (0, H_pad - H)))           # [E, H_pad]
    w_h = jnp.pad(w_rnn[M + E:, :], ((0, H_pad - H), (0, H_pad - H)))    # [H_pad, H_pad]
    b_rnn = jnp.pad(params["b_rnn"], ((0, 0), (0, H_pad - H)))           # [1, H_pad]
    w_out = jnp.pad(params["w_out"], ((0, H_pad - H), (0, V_pad - V)))   # [H_pad, V_pad]
    b_out = jnp.pad(params["b_out"], ((0, 0), (0, V_pad - V)))           # [1, V_pad]

    # Precompute the per-token embedding contribution table (vocab, H_pad) once and
    # gather it time-major: removes the (B,T,E) transpose materialization and the
    # in-kernel (T*B,E)@(E,H) matmul entirely.
    emb_table_h = jnp.dot(params["embedding"], w_e, precision=hp)        # [vocab, H_pad]
    tokens_tm = jnp.transpose(x_tokens).reshape(-1)                      # time-major [T*B]
    emb_contrib = jnp.take(emb_table_h, tokens_tm, axis=0)               # [T*B, H_pad]

    if current_hidden_state is None:
        h0 = jnp.zeros((B, H_pad), jnp.float32)
    else:
        h0 = jnp.pad(current_hidden_state[0].astype(jnp.float32),
                     ((0, 0), (0, H_pad - H)))

    logits_bm, h_final = caption_forward_fused(
        cnn_features.astype(jnp.float32), emb_contrib, h0,
        params["w_in"].astype(cdt), params["b_in"],
        w_p.astype(cdt), w_h.astype(cdt), b_rnn,
        w_out.astype(cdt), b_out,
    )

    # Free (contiguous) reshape + narrow slice back to the true vocab / hidden sizes.
    logits = logits_bm.reshape(B, T, V_pad)[:, :, :V]                    # [B, T, V]
    hidden = h_final[None, :, :H]                                        # [1, B, H]
    return logits, hidden


# ---------------------------------------------------------------------------
# Pure-JAX reference (mirrors the PyTorch forward) for verification.
# ---------------------------------------------------------------------------
def reference_forward(params, cnn_features, x_tokens):
    hp = jax.lax.Precision.HIGHEST
    x = jnp.dot(cnn_features, params["w_in"], precision=hp) + params["b_in"]
    processed = jnp.where(x > 0, x, 0.01 * x)
    B = cnn_features.shape[0]
    H = params["w_rnn"].shape[1]
    h = jnp.zeros((B, H), jnp.float32)
    emb = jnp.take(params["embedding"], x_tokens, axis=0)
    T = x_tokens.shape[1]
    logits_seq = []
    for i in range(T):
        x2 = jnp.concatenate([processed, emb[:, i, :], h], axis=1)
        h = jnp.tanh(jnp.dot(x2, params["w_rnn"], precision=hp) + params["b_rnn"])
        logits_seq.append(jnp.dot(h, params["w_out"], precision=hp) + params["b_out"])
    return jnp.stack(logits_seq, axis=1), h[None]


if __name__ == "__main__":
    # Small config consistent with the module.
    vocabulary_size = 64
    embedding_size = 32
    number_of_cnn_features = 128
    hidden_state_sizes = 32
    nn_map_size = 512          # hard-coded in ImageCaptionModel.__init__
    batch_size = 8
    seq_len = 8

    key = jax.random.PRNGKey(0)
    keys = jax.random.split(key, 8)

    rnn_in_size = nn_map_size + embedding_size   # input to the RNN cell (pre-hidden)
    params = {
        # nn.Embedding weight ~ N(0, 1)
        "embedding": jax.random.normal(keys[0], (vocabulary_size, embedding_size), jnp.float32),
        # input_layer Linear (stored transposed for x @ W)
        "w_in": jax.random.normal(keys[1], (number_of_cnn_features, nn_map_size), jnp.float32)
                / jnp.sqrt(number_of_cnn_features),
        "b_in": jax.random.normal(keys[2], (1, nn_map_size), jnp.float32) * 0.01,
        # RNNsimpleCell: randn(input+hidden, hidden) / sqrt(input+hidden), bias zeros
        "w_rnn": jax.random.normal(
            keys[3], (rnn_in_size + hidden_state_sizes, hidden_state_sizes), jnp.float32)
            / jnp.sqrt(rnn_in_size + hidden_state_sizes),
        "b_rnn": jnp.zeros((1, hidden_state_sizes), jnp.float32),
        # output Linear (stored transposed for h @ W)
        "w_out": jax.random.normal(keys[4], (hidden_state_sizes, vocabulary_size), jnp.float32)
                 / jnp.sqrt(hidden_state_sizes),
        "b_out": jax.random.normal(keys[5], (1, vocabulary_size), jnp.float32) * 0.01,
    }

    cnn_features = jax.random.normal(keys[6], (batch_size, number_of_cnn_features), jnp.float32)
    x_tokens = jax.random.randint(keys[7], (batch_size, seq_len), 0, vocabulary_size, jnp.int32)

    ref_logits, ref_hidden = reference_forward(params, cnn_features, x_tokens)

    # --- all-f32 kernel path (exact-layout verification) ---
    logits32, hidden32 = image_caption_model_forward(
        params, cnn_features, x_tokens, is_train=True, use_bf16=False)
    logits32 = jax.block_until_ready(logits32)
    hidden32 = jax.block_until_ready(hidden32)
    assert logits32.shape == (batch_size, seq_len, vocabulary_size)
    assert hidden32.shape == (1, batch_size, hidden_state_sizes)
    assert jnp.allclose(logits32, ref_logits, atol=5e-2, rtol=5e-2)
    assert jnp.allclose(hidden32, ref_hidden, atol=5e-2, rtol=5e-2)

    # --- bf16-MXU kernel path (recommended fast path: bf16 operands, f32 accumulate) ---
    logits, hidden = image_caption_model_forward(
        params, cnn_features, x_tokens, is_train=True, use_bf16=True)
    logits = jax.block_until_ready(logits)
    hidden = jax.block_until_ready(hidden)
    assert logits.shape == (batch_size, seq_len, vocabulary_size)
    assert hidden.shape == (1, batch_size, hidden_state_sizes)
    assert jnp.allclose(logits, ref_logits, atol=8e-2, rtol=8e-2)
    assert jnp.allclose(hidden, ref_hidden, atol=8e-2, rtol=8e-2)

    print("KERNEL_OK")
</pallas_src>

<mosaic_0001>
module attributes {stable_mosaic.version = 11 : i64} {
  func.func @_fused_caption_kernel(%arg0: memref<8x128xf32, #tpu.memory_space<vmem>>, %arg1: memref<64x128xf32, #tpu.memory_space<vmem>>, %arg2: memref<8x128xf32, #tpu.memory_space<vmem>>, %arg3: memref<128x512xf32, #tpu.memory_space<vmem>>, %arg4: memref<1x512xf32, #tpu.memory_space<vmem>>, %arg5: memref<512x128xf32, #tpu.memory_space<vmem>>, %arg6: memref<128x128xf32, #tpu.memory_space<vmem>>, %arg7: memref<1x128xf32, #tpu.memory_space<vmem>>, %arg8: memref<128x128xf32, #tpu.memory_space<vmem>>, %arg9: memref<1x128xf32, #tpu.memory_space<vmem>>, %arg10: memref<8x1024xf32, #tpu.memory_space<vmem>>, %arg11: memref<8x128xf32, #tpu.memory_space<vmem>>, %arg12: memref<64x128xf32, #tpu.memory_space<vmem>>) attributes {dimension_semantics = [], scalar_prefetch = 0 : i64, scratch_operands = 1 : i64, tpu.core_type = #tpu.core_type<tc>} {
    %c0 = arith.constant 0 : index
    %c0_0 = arith.constant 0 : index
    %0 = vector.load %arg0[%c0, %c0_0] : memref<8x128xf32, #tpu.memory_space<vmem>>, vector<8x128xf32>
    %c0_1 = arith.constant 0 : index
    %c0_2 = arith.constant 0 : index
    %1 = vector.load %arg3[%c0_1, %c0_2] : memref<128x512xf32, #tpu.memory_space<vmem>>, vector<128x512xf32>
    %cst = arith.constant dense<0.000000e+00> : vector<8x512xf32>
    %2 = tpu.matmul %0, %1, %cst {dimension_numbers = #tpu.dot_dimension_numbers<[1], [0], [0], [1], [0, 0, 1, 1], [], []>} : vector<8x128xf32>, vector<128x512xf32>, vector<8x512xf32> -> vector<8x512xf32>
    %c0_3 = arith.constant 0 : index
    %c0_4 = arith.constant 0 : index
    %3 = vector.load %arg4[%c0_3, %c0_4] : memref<1x512xf32, #tpu.memory_space<vmem>>, vector<1x512xf32>
    %4 = vector.broadcast %3 : vector<1x512xf32> to vector<8x512xf32>
    %5 = arith.addf %2, %4 : vector<8x512xf32>
    %cst_5 = arith.constant 0.000000e+00 : f32
    %6 = vector.broadcast %cst_5 : f32 to vector<8x512xf32>
    %7 = arith.cmpf ogt, %5, %6 : vector<8x512xf32>
    %cst_6 = arith.constant 0.00999999977 : f32
    %8 = vector.broadcast %cst_6 : f32 to vector<8x512xf32>
    %9 = arith.mulf %8, %5 : vector<8x512xf32>
    %10 = arith.select %7, %5, %9 : vector<8x512xi1>, vector<8x512xf32>
    %c0_7 = arith.constant 0 : index
    %c0_8 = arith.constant 0 : index
    %11 = vector.load %arg5[%c0_7, %c0_8] : memref<512x128xf32, #tpu.memory_space<vmem>>, vector<512x128xf32>
    %cst_9 = arith.constant dense<0.000000e+00> : vector<8x128xf32>
    %12 = tpu.matmul %10, %11, %cst_9 {dimension_numbers = #tpu.dot_dimension_numbers<[1], [0], [0], [1], [0, 0, 1, 1], [], []>} : vector<8x512xf32>, vector<512x128xf32>, vector<8x128xf32> -> vector<8x128xf32>
    %c0_10 = arith.constant 0 : index
    %c0_11 = arith.constant 0 : index
    %13 = vector.load %arg7[%c0_10, %c0_11] : memref<1x128xf32, #tpu.memory_space<vmem>>, vector<1x128xf32>
    %14 = vector.broadcast %13 : vector<1x128xf32> to vector<8x128xf32>
    %15 = arith.addf %12, %14 : vector<8x128xf32>
    %c0_12 = arith.constant 0 : index
    %c0_13 = arith.constant 0 : index
    %16 = vector.load %arg6[%c0_12, %c0_13] : memref<128x128xf32, #tpu.memory_space<vmem>>, vector<128x128xf32>
    %c0_14 = arith.constant 0 : index
    %c0_15 = arith.constant 0 : index
    %17 = vector.load %arg2[%c0_14, %c0_15] : memref<8x128xf32, #tpu.memory_space<vmem>>, vector<8x128xf32>
    %c0_16 = arith.constant 0 : index
    %c0_17 = arith.constant 0 : index
    %18 = vector.load %arg1[%c0_16, %c0_17] : memref<64x128xf32, #tpu.memory_space<vmem>>, vector<8x128xf32>
    %19 = arith.addf %15, %18 : vector<8x128xf32>
    %cst_18 = arith.constant dense<0.000000e+00> : vector<8x128xf32>
    %20 = tpu.matmul %17, %16, %cst_18 {dimension_numbers = #tpu.dot_dimension_numbers<[1], [0], [0], [1], [0, 0, 1, 1], [], []>} : vector<8x128xf32>, vector<128x128xf32>, vector<8x128xf32> -> vector<8x128xf32>
    %21 = arith.addf %19, %20 : vector<8x128xf32>
    %22 = math.tanh %21 : vector<8x128xf32>
    %c0_19 = arith.constant 0 : index
    %c0_20 = arith.constant 0 : index
    %23 = vector.load %arg12[%c0_19, %c0_20] : memref<64x128xf32, #tpu.memory_space<vmem>>, vector<8x128xf32>
    tpu.vector_store %arg12[%c0_19, %c0_20], %22 {strides = array<i32>} : memref<64x128xf32, #tpu.memory_space<vmem>>, vector<8x128xf32>,
    %c8 = arith.constant 8 : index
    %c0_21 = arith.constant 0 : index
    %24 = vector.load %arg1[%c8, %c0_21] : memref<64x128xf32, #tpu.memory_space<vmem>>, vector<8x128xf32>
    %25 = arith.addf %15, %24 : vector<8x128xf32>
    %cst_22 = arith.constant dense<0.000000e+00> : vector<8x128xf32>
    %26 = tpu.matmul %22, %16, %cst_22 {dimension_numbers = #tpu.dot_dimension_numbers<[1], [0], [0], [1], [0, 0, 1, 1], [], []>} : vector<8x128xf32>, vector<128x128xf32>, vector<8x128xf32> -> vector<8x128xf32>
    %27 = arith.addf %25, %26 : vector<8x128xf32>
    %28 = math.tanh %27 : vector<8x128xf32>
    %c8_23 = arith.constant 8 : index
    %c0_24 = arith.constant 0 : index
    %29 = vector.load %arg12[%c8_23, %c0_24] : memref<64x128xf32, #tpu.memory_space<vmem>>, vector<8x128xf32>
    tpu.vector_store %arg12[%c8_23, %c0_24], %28 {strides = array<i32>} : memref<64x128xf32, #tpu.memory_space<vmem>>, vector<8x128xf32>,
    %c16 = arith.constant 16 : index
    %c0_25 = arith.constant 0 : index
    %30 = vector.load %arg1[%c16, %c0_25] : memref<64x128xf32, #tpu.memory_space<vmem>>, vector<8x128xf32>
    %31 = arith.addf %15, %30 : vector<8x128xf32>
    %cst_26 = arith.constant dense<0.000000e+00> : vector<8x128xf32>
    %32 = tpu.matmul %28, %16, %cst_26 {dimension_numbers = #tpu.dot_dimension_numbers<[1], [0], [0], [1], [0, 0, 1, 1], [], []>} : vector<8x128xf32>, vector<128x128xf32>, vector<8x128xf32> -> vector<8x128xf32>
    %33 = arith.addf %31, %32 : vector<8x128xf32>
    %34 = math.tanh %33 : vector<8x128xf32>
    %c16_27 = arith.constant 16 : index
    %c0_28 = arith.constant 0 : index
    %35 = vector.load %arg12[%c16_27, %c0_28] : memref<64x128xf32, #tpu.memory_space<vmem>>, vector<8x128xf32>
    tpu.vector_store %arg12[%c16_27, %c0_28], %34 {strides = array<i32>} : memref<64x128xf32, #tpu.memory_space<vmem>>, vector<8x128xf32>,
    %c24 = arith.constant 24 : index
    %c0_29 = arith.constant 0 : index
    %36 = vector.load %arg1[%c24, %c0_29] : memref<64x128xf32, #tpu.memory_space<vmem>>, vector<8x128xf32>
    %37 = arith.addf %15, %36 : vector<8x128xf32>
    %cst_30 = arith.constant dense<0.000000e+00> : vector<8x128xf32>
    %38 = tpu.matmul %34, %16, %cst_30 {dimension_numbers = #tpu.dot_dimension_numbers<[1], [0], [0], [1], [0, 0, 1, 1], [], []>} : vector<8x128xf32>, vector<128x128xf32>, vector<8x128xf32> -> vector<8x128xf32>
    %39 = arith.addf %37, %38 : vector<8x128xf32>
    %40 = math.tanh %39 : vector<8x128xf32>
    %c24_31 = arith.constant 24 : index
    %c0_32 = arith.constant 0 : index
    %41 = vector.load %arg12[%c24_31, %c0_32] : memref<64x128xf32, #tpu.memory_space<vmem>>, vector<8x128xf32>
    tpu.vector_store %arg12[%c24_31, %c0_32], %40 {strides = array<i32>} : memref<64x128xf32, #tpu.memory_space<vmem>>, vector<8x128xf32>,
    %c32 = arith.constant 32 : index
    %c0_33 = arith.constant 0 : index
    %42 = vector.load %arg1[%c32, %c0_33] : memref<64x128xf32, #tpu.memory_space<vmem>>, vector<8x128xf32>
    %43 = arith.addf %15, %42 : vector<8x128xf32>
    %cst_34 = arith.constant dense<0.000000e+00> : vector<8x128xf32>
    %44 = tpu.matmul %40, %16, %cst_34 {dimension_numbers = #tpu.dot_dimension_numbers<[1], [0], [0], [1], [0, 0, 1, 1], [], []>} : vector<8x128xf32>, vector<128x128xf32>, vector<8x128xf32> -> vector<8x128xf32>
    %45 = arith.addf %43, %44 : vector<8x128xf32>
    %46 = math.tanh %45 : vector<8x128xf32>
    %c32_35 = arith.constant 32 : index
    %c0_36 = arith.constant 0 : index
    %47 = vector.load %arg12[%c32_35, %c0_36] : memref<64x128xf32, #tpu.memory_space<vmem>>, vector<8x128xf32>
    tpu.vector_store %arg12[%c32_35, %c0_36], %46 {strides = array<i32>} : memref<64x128xf32, #tpu.memory_space<vmem>>, vector<8x128xf32>,
    %c40 = arith.constant 40 : index
    %c0_37 = arith.constant 0 : index
    %48 = vector.load %arg1[%c40, %c0_37] : memref<64x128xf32, #tpu.memory_space<vmem>>, vector<8x128xf32>
    %49 = arith.addf %15, %48 : vector<8x128xf32>
    %cst_38 = arith.constant dense<0.000000e+00> : vector<8x128xf32>
    %50 = tpu.matmul %46, %16, %cst_38 {dimension_numbers = #tpu.dot_dimension_numbers<[1], [0], [0], [1], [0, 0, 1, 1], [], []>} : vector<8x128xf32>, vector<128x128xf32>, vector<8x128xf32> -> vector<8x128xf32>
    %51 = arith.addf %49, %50 : vector<8x128xf32>
    %52 = math.tanh %51 : vector<8x128xf32>
    %c40_39 = arith.constant 40 : index
    %c0_40 = arith.constant 0 : index
    %53 = vector.load %arg12[%c40_39, %c0_40] : memref<64x128xf32, #tpu.memory_space<vmem>>, vector<8x128xf32>
    tpu.vector_store %arg12[%c40_39, %c0_40], %52 {strides = array<i32>} : memref<64x128xf32, #tpu.memory_space<vmem>>, vector<8x128xf32>,
    %c48 = arith.constant 48 : index
    %c0_41 = arith.constant 0 : index
    %54 = vector.load %arg1[%c48, %c0_41] : memref<64x128xf32, #tpu.memory_space<vmem>>, vector<8x128xf32>
    %55 = arith.addf %15, %54 : vector<8x128xf32>
    %cst_42 = arith.constant dense<0.000000e+00> : vector<8x128xf32>
    %56 = tpu.matmul %52, %16, %cst_42 {dimension_numbers = #tpu.dot_dimension_numbers<[1], [0], [0], [1], [0, 0, 1, 1], [], []>} : vector<8x128xf32>, vector<128x128xf32>, vector<8x128xf32> -> vector<8x128xf32>
    %57 = arith.addf %55, %56 : vector<8x128xf32>
    %58 = math.tanh %57 : vector<8x128xf32>
    %c48_43 = arith.constant 48 : index
    %c0_44 = arith.constant 0 : index
    %59 = vector.load %arg12[%c48_43, %c0_44] : memref<64x128xf32, #tpu.memory_space<vmem>>, vector<8x128xf32>
    tpu.vector_store %arg12[%c48_43, %c0_44], %58 {strides = array<i32>} : memref<64x128xf32, #tpu.memory_space<vmem>>, vector<8x128xf32>,
    %c56 = arith.constant 56 : index
    %c0_45 = arith.constant 0 : index
    %60 = vector.load %arg1[%c56, %c0_45] : memref<64x128xf32, #tpu.memory_space<vmem>>, vector<8x128xf32>
    %61 = arith.addf %15, %60 : vector<8x128xf32>
    %cst_46 = arith.constant dense<0.000000e+00> : vector<8x128xf32>
    %62 = tpu.matmul %58, %16, %cst_46 {dimension_numbers = #tpu.dot_dimension_numbers<[1], [0], [0], [1], [0, 0, 1, 1], [], []>} : vector<8x128xf32>, vector<128x128xf32>, vector<8x128xf32> -> vector<8x128xf32>
    %63 = arith.addf %61, %62 : vector<8x128xf32>
    %64 = math.tanh %63 : vector<8x128xf32>
    %c56_47 = arith.constant 56 : index
    %c0_48 = arith.constant 0 : index
    %65 = vector.load %arg12[%c56_47, %c0_48] : memref<64x128xf32, #tpu.memory_space<vmem>>, vector<8x128xf32>
    tpu.vector_store %arg12[%c56_47, %c0_48], %64 {strides = array<i32>} : memref<64x128xf32, #tpu.memory_space<vmem>>, vector<8x128xf32>,
    %c0_49 = arith.constant 0 : index
    %c0_50 = arith.constant 0 : index
    %66 = vector.load %arg12[%c0_49, %c0_50] : memref<64x128xf32, #tpu.memory_space<vmem>>, vector<64x128xf32>
    %c0_51 = arith.constant 0 : index
    %c0_52 = arith.constant 0 : index
    %67 = vector.load %arg8[%c0_51, %c0_52] : memref<128x128xf32, #tpu.memory_space<vmem>>, vector<128x128xf32>
    %cst_53 = arith.constant dense<0.000000e+00> : vector<64x128xf32>
    %68 = tpu.matmul %66, %67, %cst_53 {dimension_numbers = #tpu.dot_dimension_numbers<[1], [0], [0], [1], [0, 0, 1, 1], [], []>} : vector<64x128xf32>, vector<128x128xf32>, vector<64x128xf32> -> vector<64x128xf32>
    %c0_54 = arith.constant 0 : index
    %c0_55 = arith.constant 0 : index
    %69 = vector.load %arg9[%c0_54, %c0_55] : memref<1x128xf32, #tpu.memory_space<vmem>>, vector<1x128xf32>
    %70 = vector.broadcast %69 : vector<1x128xf32> to vector<64x128xf32>
    %71 = arith.addf %68, %70 : vector<64x128xf32>
    %72 = vector.extract_strided_slice %71 {offsets = [0, 0], sizes = [8, 128], strides = [1, 1]} : vector<64x128xf32> to vector<8x128xf32>
    %c0_56 = arith.constant 0 : index
    %c0_57 = arith.constant 0 : index
    %73 = vector.load %arg10[%c0_56, %c0_57] : memref<8x1024xf32, #tpu.memory_space<vmem>>, vector<8x128xf32>
    tpu.vector_store %arg10[%c0_56, %c0_57], %72 {strides = array<i32>} : memref<8x1024xf32, #tpu.memory_space<vmem>>, vector<8x128xf32>,
    %74 = vector.extract_strided_slice %71 {offsets = [8, 0], sizes = [8, 128], strides = [1, 1]} : vector<64x128xf32> to vector<8x128xf32>
    %c0_58 = arith.constant 0 : index
    %c128 = arith.constant 128 : index
    %75 = vector.load %arg10[%c0_58, %c128] : memref<8x1024xf32, #tpu.memory_space<vmem>>, vector<8x128xf32>
    tpu.vector_store %arg10[%c0_58, %c128], %74 {strides = array<i32>} : memref<8x1024xf32, #tpu.memory_space<vmem>>, vector<8x128xf32>,
    %76 = vector.extract_strided_slice %71 {offsets = [16, 0], sizes = [8, 128], strides = [1, 1]} : vector<64x128xf32> to vector<8x128xf32>
    %c0_59 = arith.constant 0 : index
    %c256 = arith.constant 256 : index
    %77 = vector.load %arg10[%c0_59, %c256] : memref<8x1024xf32, #tpu.memory_space<vmem>>, vector<8x128xf32>
    tpu.vector_store %arg10[%c0_59, %c256], %76 {strides = array<i32>} : memref<8x1024xf32, #tpu.memory_space<vmem>>, vector<8x128xf32>,
    %78 = vector.extract_strided_slice %71 {offsets = [24, 0], sizes = [8, 128], strides = [1, 1]} : vector<64x128xf32> to vector<8x128xf32>
    %c0_60 = arith.constant 0 : index
    %c384 = arith.constant 384 : index
    %79 = vector.load %arg10[%c0_60, %c384] : memref<8x1024xf32, #tpu.memory_space<vmem>>, vector<8x128xf32>
    tpu.vector_store %arg10[%c0_60, %c384], %78 {strides = array<i32>} : memref<8x1024xf32, #tpu.memory_space<vmem>>, vector<8x128xf32>,
    %80 = vector.extract_strided_slice %71 {offsets = [32, 0], sizes = [8, 128], strides = [1, 1]} : vector<64x128xf32> to vector<8x128xf32>
    %c0_61 = arith.constant 0 : index
    %c512 = arith.constant 512 : index
    %81 = vector.load %arg10[%c0_61, %c512] : memref<8x1024xf32, #tpu.memory_space<vmem>>, vector<8x128xf32>
    tpu.vector_store %arg10[%c0_61, %c512], %80 {strides = array<i32>} : memref<8x1024xf32, #tpu.memory_space<vmem>>, vector<8x128xf32>,
    %82 = vector.extract_strided_slice %71 {offsets = [40, 0], sizes = [8, 128], strides = [1, 1]} : vector<64x128xf32> to vector<8x128xf32>
    %c0_62 = arith.constant 0 : index
    %c640 = arith.constant 640 : index
    %83 = vector.load %arg10[%c0_62, %c640] : memref<8x1024xf32, #tpu.memory_space<vmem>>, vector<8x128xf32>
    tpu.vector_store %arg10[%c0_62, %c640], %82 {strides = array<i32>} : memref<8x1024xf32, #tpu.memory_space<vmem>>, vector<8x128xf32>,
    %84 = vector.extract_strided_slice %71 {offsets = [48, 0], sizes = [8, 128], strides = [1, 1]} : vector<64x128xf32> to vector<8x128xf32>
    %c0_63 = arith.constant 0 : index
    %c768 = arith.constant 768 : index
    %85 = vector.load %arg10[%c0_63, %c768] : memref<8x1024xf32, #tpu.memory_space<vmem>>, vector<8x128xf32>
    tpu.vector_store %arg10[%c0_63, %c768], %84 {strides = array<i32>} : memref<8x1024xf32, #tpu.memory_space<vmem>>, vector<8x128xf32>,
    %86 = vector.extract_strided_slice %71 {offsets = [56, 0], sizes = [8, 128], strides = [1, 1]} : vector<64x128xf32> to vector<8x128xf32>
    %c0_64 = arith.constant 0 : index
    %c896 = arith.constant 896 : index
    %87 = vector.load %arg10[%c0_64, %c896] : memref<8x1024xf32, #tpu.memory_space<vmem>>, vector<8x128xf32>
    tpu.vector_store %arg10[%c0_64, %c896], %86 {strides = array<i32>} : memref<8x1024xf32, #tpu.memory_space<vmem>>, vector<8x128xf32>,
    %c0_65 = arith.constant 0 : index
    %c0_66 = arith.constant 0 : index
    %88 = vector.load %arg11[%c0_65, %c0_66] : memref<8x128xf32, #tpu.memory_space<vmem>>, vector<8x128xf32>
    tpu.vector_store %arg11[%c0_65, %c0_66], %64 {strides = array<i32>} : memref<8x128xf32, #tpu.memory_space<vmem>>, vector<8x128xf32>,
    return
  }
}

</mosaic_0001>

<llo_original>
// kernel: tpu_custom_call.1
$region0: #{tpu_custom_call.1}
  #allocation0 [shape = 'u32[]', space=smem, size = 0x4, offset = 0x4, fixed_abs, tag = 'smem constant byte address 0x4 - core index']
  #allocation1 [shape = 'u32[144,128]{1,0:T(1,128)}', space=vmem, size = 0x12000, scoped, tag = 'internal scratch']
  #allocation2 [shape = 'f32[64,128]{1,0:T(8,128)}', space=vmem, size = 0x8000, scoped, tag = 'scratch operand']
  %s0 = inlined_call_operand.hbm [shape: f32[8,128], index: 0, kind: input, shape index: {}]
  %s1 = inlined_call_operand.hbm [shape: f32[64,128], index: 1, kind: input, shape index: {}]
  %s2 = inlined_call_operand.hbm [shape: f32[8,128], index: 2, kind: input, shape index: {}]
  %s3 = inlined_call_operand.hbm [shape: f32[128,512], index: 3, kind: input, shape index: {}]
  %s4 = inlined_call_operand.vmem [shape: f32[1,512], index: 4, kind: input, shape index: {}]
  %s5 = inlined_call_operand.hbm [shape: f32[512,128], index: 5, kind: input, shape index: {}]
  %s6 = inlined_call_operand.hbm [shape: f32[128,128], index: 6, kind: input, shape index: {}]
  %s7 = inlined_call_operand.vmem [shape: f32[1,128], index: 7, kind: input, shape index: {}]
  %s8 = inlined_call_operand.hbm [shape: f32[128,128], index: 8, kind: input, shape index: {}]
  %s9 = inlined_call_operand.vmem [shape: f32[1,128], index: 9, kind: input, shape index: {}]
  %s10 = inlined_call_operand.hbm [shape: f32[8,1024], index: 10, kind: output, shape index: {0}]
  %s11 = inlined_call_operand.hbm [shape: f32[8,128], index: 11, kind: output, shape index: {1}]
  %12 = xla_tuple %s10, %s11
  %s13 = sld [smem:[#allocation0]]
  $region86: #{tpu_custom_call.1} parent=0
    _
  %s15 = ssub.s32 1, %s13
  %s16 = scalar_select 0, %s15, %s13
  $region1: #{tpu_custom_call.1} parent=0
    #allocation3 [shape = 'u8[4096]{0}', space=vmem, size = 0x1000, scoped, tag = 'input window, operand 0, single buffered']
    #allocation4 [shape = 's32[1]{0}', space=sflag, size = 0x4, scoped, tag = 'scoped memory for tpu_custom_call.1']
    #allocation5 [shape = 's32[1]{0}', space=sflag, size = 0x4, scoped, tag = 'scoped memory for tpu_custom_call.1']
    #allocation6 [shape = 'u8[32768]{0}', space=vmem, size = 0x8000, scoped, tag = 'input window, operand 1, single buffered']
    #allocation7 [shape = 's32[1]{0}', space=sflag, size = 0x4, scoped, tag = 'scoped memory for tpu_custom_call.1']
    #allocation8 [shape = 'u8[4096]{0}', space=vmem, size = 0x1000, scoped, tag = 'input window, operand 2, single buffered']
    #allocation9 [shape = 'u8[262144]{0}', space=vmem, size = 0x40000, scoped, tag = 'input window, operand 3, single buffered']
    #allocation10 [shape = 's32[1]{0}', space=sflag, size = 0x4, scoped, tag = 'scoped memory for tpu_custom_call.1']
    #allocation11 [shape = 'u8[262144]{0}', space=vmem, size = 0x40000, scoped, tag = 'input window, operand 5, single buffered']
    #allocation12 [shape = 'u8[65536]{0}', space=vmem, size = 0x10000, scoped, tag = 'input window, operand 6, single buffered']
    #allocation13 [shape = 's32[1]{0}', space=sflag, size = 0x4, scoped, tag = 'scoped memory for tpu_custom_call.1']
    #allocation14 [shape = 'u8[65536]{0}', space=vmem, size = 0x10000, scoped, tag = 'input window, operand 8, single buffered']
    #allocation15 [shape = 'u8[32768]{0}', space=vmem, size = 0x8000, scoped, tag = 'output window, operand 0, single buffered']
    #allocation16 [shape = 'u8[4096]{0}', space=vmem, size = 0x1000, scoped, tag = 'output window, operand 1, single buffered']
    #allocation17 [shape = 's32[1]{0}', space=sflag, size = 0x4, scoped, tag = 'scoped memory for tpu_custom_call.1']
    %17 = vsyncpa [#allocation4], 0
    %18 = vsyncpa [#allocation7], 0
    %19 = vsyncpa [#allocation10], 0
    %20 = vsyncpa [#allocation13], 0
    %21 = vsyncpa [#allocation5], 0
    %22 = vsyncpa [#allocation17], 0
    // Predicated region
    $region2: #{tpu_custom_call.1} parent=1 // pred_check
      _
    $region3: #{tpu_custom_call.1} parent=1 // pred_check_branch
      %24 = sbr.rel (0) target = $region5
    $region4: #{tpu_custom_call.1} parent=1 // pred_region
      %s26 = ssub.s32 128, 128
      %27 = vsyncadd [#allocation4], %s26
      %s29 = sshll.u32 [#allocation3], 4
      %s30 = int_to_ptr.vmem [resolvable:$true] %s29
      %32 = dma.hbm_to_vmem [thread:$0]  %s0, 128, %s30, [#allocation4]
    $region5: #{tpu_custom_call.1} parent=1 // pred_fallthru
      _
    // Predicated region
    $region6: #{tpu_custom_call.1} parent=1 // pred_check
      _
    $region7: #{tpu_custom_call.1} parent=1 // pred_check_branch
      %34 = sbr.rel (0) target = $region9
    $region8: #{tpu_custom_call.1} parent=1 // pred_region
      %s36 = ssub.s32 1024, 1024
      %37 = vsyncadd [#allocation7], %s36
      %s38 = sshll.u32 [#allocation6], 4
      %s39 = int_to_ptr.vmem [resolvable:$true] %s38
      %44 = dma.hbm_to_vmem [thread:$0]  %s1, 1024, %s39, [#allocation7], 128, 128, 8
    $region9: #{tpu_custom_call.1} parent=1 // pred_fallthru
      _
    // Predicated region
    $region10: #{tpu_custom_call.1} parent=1 // pred_check
      _
    $region11: #{tpu_custom_call.1} parent=1 // pred_check_branch
      %46 = sbr.rel (0) target = $region13
    $region12: #{tpu_custom_call.1} parent=1 // pred_region
      %s48 = ssub.s32 128, 128
      %49 = vsyncadd [#allocation7], %s48
      %s51 = sshll.u32 [#allocation8], 4
      %s52 = int_to_ptr.vmem [resolvable:$true] %s51
      %54 = dma.hbm_to_vmem [thread:$0]  %s2, 128, %s52, [#allocation7]
    $region13: #{tpu_custom_call.1} parent=1 // pred_fallthru
      _
    // Predicated region
    $region14: #{tpu_custom_call.1} parent=1 // pred_check
      _
    $region15: #{tpu_custom_call.1} parent=1 // pred_check_branch
      %56 = sbr.rel (0) target = $region17
    $region16: #{tpu_custom_call.1} parent=1 // pred_region
      %s58 = ssub.s32 8192, 8192
      %59 = vsyncadd [#allocation10], %s58
      %s60 = sshll.u32 [#allocation9], 4
      %s61 = int_to_ptr.vmem [resolvable:$true] %s60
      %66 = dma.hbm_to_vmem [thread:$0]  %s3, 8192, %s61, [#allocation10], 512, 512, 32
    $region17: #{tpu_custom_call.1} parent=1 // pred_fallthru
      _
    // Predicated region
    $region18: #{tpu_custom_call.1} parent=1 // pred_check
      _
    $region19: #{tpu_custom_call.1} parent=1 // pred_check_branch
      %68 = sbr.rel (0) target = $region21
    $region20: #{tpu_custom_call.1} parent=1 // pred_region
      _
    $region21: #{tpu_custom_call.1} parent=1 // pred_fallthru
      _
    // Predicated region
    $region22: #{tpu_custom_call.1} parent=1 // pred_check
      _
    $region23: #{tpu_custom_call.1} parent=1 // pred_check_branch
      %70 = sbr.rel (0) target = $region25
    $region24: #{tpu_custom_call.1} parent=1 // pred_region
      %s72 = ssub.s32 8192, 8192
      %73 = vsyncadd [#allocation10], %s72
      %s74 = sshll.u32 [#allocation11], 4
      %s75 = int_to_ptr.vmem [resolvable:$true] %s74
      %80 = dma.hbm_to_vmem [thread:$0]  %s5, 8192, %s75, [#allocation10], 128, 128, 8
    $region25: #{tpu_custom_call.1} parent=1 // pred_fallthru
      _
    // Predicated region
    $region26: #{tpu_custom_call.1} parent=1 // pred_check
      _
    $region27: #{tpu_custom_call.1} parent=1 // pred_check_branch
      %82 = sbr.rel (0) target = $region29
    $region28: #{tpu_custom_call.1} parent=1 // pred_region
      %s84 = ssub.s32 2048, 2048
      %85 = vsyncadd [#allocation13], %s84
      %s86 = sshll.u32 [#allocation12], 4
      %s87 = int_to_ptr.vmem [resolvable:$true] %s86
      %92 = dma.hbm_to_vmem [thread:$0]  %s6, 2048, %s87, [#allocation13], 128, 128, 8
    $region29: #{tpu_custom_call.1} parent=1 // pred_fallthru
      _
    // Predicated region
    $region30: #{tpu_custom_call.1} parent=1 // pred_check
      _
    $region31: #{tpu_custom_call.1} parent=1 // pred_check_branch
      %94 = sbr.rel (0) target = $region33
    $region32: #{tpu_custom_call.1} parent=1 // pred_region
      _
    $region33: #{tpu_custom_call.1} parent=1 // pred_fallthru
      _
    // Predicated region
    $region34: #{tpu_custom_call.1} parent=1 // pred_check
      _
    $region35: #{tpu_custom_call.1} parent=1 // pred_check_branch
      %96 = sbr.rel (0) target = $region37
    $region36: #{tpu_custom_call.1} parent=1 // pred_region
      %s98 = ssub.s32 2048, 2048
      %99 = vsyncadd [#allocation13], %s98
      %s100 = sshll.u32 [#allocation14], 4
      %s101 = int_to_ptr.vmem [resolvable:$true] %s100
      %106 = dma.hbm_to_vmem [thread:$0]  %s8, 2048, %s101, [#allocation13], 128, 128, 8
    $region37: #{tpu_custom_call.1} parent=1 // pred_fallthru
      _
    // Predicated region
    $region38: #{tpu_custom_call.1} parent=1 // pred_check
      _
    $region39: #{tpu_custom_call.1} parent=1 // pred_check_branch
      %108 = sbr.rel (0) target = $region41
    $region40: #{tpu_custom_call.1} parent=1 // pred_region
      _
    $region41: #{tpu_custom_call.1} parent=1 // pred_fallthru
      _
    // Predicated region
    $region42: #{tpu_custom_call.1} parent=1 // pred_check
      _
    $region43: #{tpu_custom_call.1} parent=1 // pred_check_branch
      %110 = sbr.rel (0) target = $region45
    $region44: #{tpu_custom_call.1} parent=1 // pred_region
      %111 = dma.done [#allocation4], 128
    $region45: #{tpu_custom_call.1} parent=1 // pred_fallthru
      _
    // Predicated region
    $region46: #{tpu_custom_call.1} parent=1 // pred_check
      _
    $region47: #{tpu_custom_call.1} parent=1 // pred_check_branch
      %113 = sbr.rel (0) target = $region49
    $region48: #{tpu_custom_call.1} parent=1 // pred_region
      %114 = dma.done [#allocation7], 1024
    $region49: #{tpu_custom_call.1} parent=1 // pred_fallthru
      _
    // Predicated region
    $region50: #{tpu_custom_call.1} parent=1 // pred_check
      _
    $region51: #{tpu_custom_call.1} parent=1 // pred_check_branch
      %116 = sbr.rel (0) target = $region53
    $region52: #{tpu_custom_call.1} parent=1 // pred_region
      %117 = dma.done [#allocation7], 128
    $region53: #{tpu_custom_call.1} parent=1 // pred_fallthru
      _
    // Predicated region
    $region54: #{tpu_custom_call.1} parent=1 // pred_check
      _
    $region55: #{tpu_custom_call.1} parent=1 // pred_check_branch
      %119 = sbr.rel (0) target = $region57
    $region56: #{tpu_custom_call.1} parent=1 // pred_region
      %120 = dma.done [#allocation10], 8192
    $region57: #{tpu_custom_call.1} parent=1 // pred_fallthru
      _
    // Predicated region
    $region58: #{tpu_custom_call.1} parent=1 // pred_check
      _
    $region59: #{tpu_custom_call.1} parent=1 // pred_check_branch
      %122 = sbr.rel (0) target = $region61
    $region60: #{tpu_custom_call.1} parent=1 // pred_region
      %123 = dma.done [#allocation10], 8192
    $region61: #{tpu_custom_call.1} parent=1 // pred_fallthru
      _
    // Predicated region
    $region62: #{tpu_custom_call.1} parent=1 // pred_check
      _
    $region63: #{tpu_custom_call.1} parent=1 // pred_check_branch
      %125 = sbr.rel (0) target = $region65
    $region64: #{tpu_custom_call.1} parent=1 // pred_region
      %126 = dma.done [#allocation13], 2048
    $region65: #{tpu_custom_call.1} parent=1 // pred_fallthru
      _
    // Predicated region
    $region66: #{tpu_custom_call.1} parent=1 // pred_check
      _
    $region67: #{tpu_custom_call.1} parent=1 // pred_check_branch
      %128 = sbr.rel (0) target = $region69
    $region68: #{tpu_custom_call.1} parent=1 // pred_region
      %129 = dma.done [#allocation13], 2048
    $region69: #{tpu_custom_call.1} parent=1 // pred_fallthru
      _
    %v130 = vld [vmem:[#allocation3] sm:$0xff]
    %v131 = vld [vmem:[#allocation9] sm:$0xff]
    %v132 = vld [vmem:[#allocation9 + $0x8] sm:$0xff]
    %v133 = vld [vmem:[#allocation9 + $0x10] sm:$0xff]
    %v134 = vld [vmem:[#allocation9 + $0x18] sm:$0xff]
    %v135 = vld [vmem:[#allocation9 + $0x20] sm:$0xff]
    %v136 = vld [vmem:[#allocation9 + $0x28] sm:$0xff]
    %v137 = vld [vmem:[#allocation9 + $0x30] sm:$0xff]
    %v138 = vld [vmem:[#allocation9 + $0x38] sm:$0xff]
    %v139 = vld [vmem:[#allocation9 + $0x40] sm:$0xff]
    %v140 = vld [vmem:[#allocation9 + $0x48] sm:$0xff]
    %v141 = vld [vmem:[#allocation9 + $0x50] sm:$0xff]
    %v142 = vld [vmem:[#allocation9 + $0x58] sm:$0xff]
    %v143 = vld [vmem:[#allocation9 + $0x60] sm:$0xff]
    %v144 = vld [vmem:[#allocation9 + $0x68] sm:$0xff]
    %v145 = vld [vmem:[#allocation9 + $0x70] sm:$0xff]
    %v146 = vld [vmem:[#allocation9 + $0x78] sm:$0xff]
    %v147 = vld [vmem:[#allocation9 + $0x80] sm:$0xff]
    %v148 = vld [vmem:[#allocation9 + $0x88] sm:$0xff]
    %v149 = vld [vmem:[#allocation9 + $0x90] sm:$0xff]
    %v150 = vld [vmem:[#allocation9 + $0x98] sm:$0xff]
    %v151 = vld [vmem:[#allocation9 + $0xa0] sm:$0xff]
    %v152 = vld [vmem:[#allocation9 + $0xa8] sm:$0xff]
    %v153 = vld [vmem:[#allocation9 + $0xb0] sm:$0xff]
    %v154 = vld [vmem:[#allocation9 + $0xb8] sm:$0xff]
    %v155 = vld [vmem:[#allocation9 + $0xc0] sm:$0xff]
    %v156 = vld [vmem:[#allocation9 + $0xc8] sm:$0xff]
    %v157 = vld [vmem:[#allocation9 + $0xd0] sm:$0xff]
    %v158 = vld [vmem:[#allocation9 + $0xd8] sm:$0xff]
    %v159 = vld [vmem:[#allocation9 + $0xe0] sm:$0xff]
    %v160 = vld [vmem:[#allocation9 + $0xe8] sm:$0xff]
    %v161 = vld [vmem:[#allocation9 + $0xf0] sm:$0xff]
    %v162 = vld [vmem:[#allocation9 + $0xf8] sm:$0xff]
    %v163 = vld [vmem:[#allocation9 + $0x100] sm:$0xff]
    %v164 = vld [vmem:[#allocation9 + $0x108] sm:$0xff]
    %v165 = vld [vmem:[#allocation9 + $0x110] sm:$0xff]
    %v166 = vld [vmem:[#allocation9 + $0x118] sm:$0xff]
    %v167 = vld [vmem:[#allocation9 + $0x120] sm:$0xff]
    %v168 = vld [vmem:[#allocation9 + $0x128] sm:$0xff]
    %v169 = vld [vmem:[#allocation9 + $0x130] sm:$0xff]
    %v170 = vld [vmem:[#allocation9 + $0x138] sm:$0xff]
    %v171 = vld [vmem:[#allocation9 + $0x140] sm:$0xff]
    %v172 = vld [vmem:[#allocation9 + $0x148] sm:$0xff]
    %v173 = vld [vmem:[#allocation9 + $0x150] sm:$0xff]
    %v174 = vld [vmem:[#allocation9 + $0x158] sm:$0xff]
    %v175 = vld [vmem:[#allocation9 + $0x160] sm:$0xff]
    %v176 = vld [vmem:[#allocation9 + $0x168] sm:$0xff]
    %v177 = vld [vmem:[#allocation9 + $0x170] sm:$0xff]
    %v178 = vld [vmem:[#allocation9 + $0x178] sm:$0xff]
    %v179 = vld [vmem:[#allocation9 + $0x180] sm:$0xff]
    %v180 = vld [vmem:[#allocation9 + $0x188] sm:$0xff]
    %v181 = vld [vmem:[#allocation9 + $0x190] sm:$0xff]
    %v182 = vld [vmem:[#allocation9 + $0x198] sm:$0xff]
    %v183 = vld [vmem:[#allocation9 + $0x1a0] sm:$0xff]
    %v184 = vld [vmem:[#allocation9 + $0x1a8] sm:$0xff]
    %v185 = vld [vmem:[#allocation9 + $0x1b0] sm:$0xff]
    %v186 = vld [vmem:[#allocation9 + $0x1b8] sm:$0xff]
    %v187 = vld [vmem:[#allocation9 + $0x1c0] sm:$0xff]
    %v188 = vld [vmem:[#allocation9 + $0x1c8] sm:$0xff]
    %v189 = vld [vmem:[#allocation9 + $0x1d0] sm:$0xff]
    %v190 = vld [vmem:[#allocation9 + $0x1d8] sm:$0xff]
    %v191 = vld [vmem:[#allocation9 + $0x1e0] sm:$0xff]
    %v192 = vld [vmem:[#allocation9 + $0x1e8] sm:$0xff]
    %v193 = vld [vmem:[#allocation9 + $0x1f0] sm:$0xff]
    %v194 = vld [vmem:[#allocation9 + $0x1f8] sm:$0xff]
    %v195 = vld [vmem:[%s4] sm:$0xf]
    %v197 = vlaneseq
    %v198 = vshrl.u32 %v197, 7
    %v199 = vsub.s32 0, %v198
    %v200 = vrot.slane %v195, %v199
    %v201 = vlaneseq
    %v202 = vshrl.u32 %v201, 7
    %v203 = vsub.s32 1, %v202
    %v204 = vrot.slane %v195, %v203
    %v205 = vlaneseq
    %v206 = vshrl.u32 %v205, 7
    %v207 = vsub.s32 2, %v206
    %v208 = vrot.slane %v195, %v207
    %v209 = vlaneseq
    %v210 = vshrl.u32 %v209, 7
    %v211 = vsub.s32 3, %v210
    %v212 = vrot.slane %v195, %v211
    %217 = vmatprep.subr.mxu0 %v132
    %218 = vmatpush1.msra.mxu0 %v131
    %219 = vmatprep.subr.mxu0 %v136
    %220 = vmatpush1.msra.mxu0 %v135
    %221 = vmatprep.subr.mxu0 %v140
    %222 = vmatpush1.msra.mxu0 %v139
    %223 = vmatprep.subr.mxu0 %v144
    %224 = vmatpush1.msra.mxu0 %v143
    %225 = vmatprep.subr.mxu0 %v148
    %226 = vmatpush1.msra.mxu0 %v147
    %227 = vmatprep.subr.mxu0 %v152
    %228 = vmatpush1.msra.mxu0 %v151
    %229 = vmatprep.subr.mxu0 %v156
    %230 = vmatpush1.msra.mxu0 %v155
    %231 = vmatprep.subr.mxu0 %v160
    %232 = vmatpush1.msra.mxu0 %v159
    %233 = vmatprep.subr.mxu0 %v164
    %234 = vmatpush1.msra.mxu0 %v163
    %235 = vmatprep.subr.mxu0 %v168
    %236 = vmatpush1.msra.mxu0 %v167
    %237 = vmatprep.subr.mxu0 %v172
    %238 = vmatpush1.msra.mxu0 %v171
    %239 = vmatprep.subr.mxu0 %v176
    %240 = vmatpush1.msra.mxu0 %v175
    %241 = vmatprep.subr.mxu0 %v180
    %242 = vmatpush1.msra.mxu0 %v179
    %243 = vmatprep.subr.mxu0 %v184
    %244 = vmatpush1.msra.mxu0 %v183
    %245 = vmatprep.subr.mxu0 %v188
    %246 = vmatpush1.msra.mxu0 %v187
    %247 = vmatprep.subr.mxu0 %v192
    %248 = vmatpush1.msra.mxu0 %v191
    %249 = vmatprep.subr.mxu0 0.0
    %250 = vmatpush1.msra.mxu0 0.0
    %251 = vmatprep.subr.mxu0 0.0
    %252 = vmatpush1.msra.mxu0 0.0
    %253 = vmatprep.subr.mxu0 0.0
    %254 = vmatpush1.msra.mxu0 0.0
    %255 = vmatprep.subr.mxu0 0.0
    %256 = vmatpush1.msra.mxu0 0.0
    %257 = vmatprep.subr.mxu0 0.0
    %258 = vmatpush1.msra.mxu0 0.0
    %259 = vmatprep.subr.mxu0 0.0
    %260 = vmatpush1.msra.mxu0 0.0
    %261 = vmatprep.subr.mxu0 0.0
    %262 = vmatpush1.msra.mxu0 0.0
    %263 = vmatprep.subr.mxu0 0.0
    %264 = vmatpush1.msra.mxu0 0.0
    %265 = vmatprep.subr.mxu0 0.0
    %266 = vmatpush1.msra.mxu0 0.0
    %267 = vmatprep.subr.mxu0 0.0
    %268 = vmatpush1.msra.mxu0 0.0
    %269 = vmatprep.subr.mxu0 0.0
    %270 = vmatpush1.msra.mxu0 0.0
    %271 = vmatprep.subr.mxu0 0.0
    %272 = vmatpush1.msra.mxu0 0.0
    %273 = vmatprep.subr.mxu0 0.0
    %274 = vmatpush1.msra.mxu0 0.0
    %275 = vmatprep.subr.mxu0 0.0
    %276 = vmatpush1.msra.mxu0 0.0
    %277 = vmatprep.subr.mxu0 0.0
    %278 = vmatpush1.msra.mxu0 0.0
    %279 = vmatprep.subr.mxu0 0.0
    %280 = vmatpush1.msra.mxu0 0.0
    %281 = vmatprep.mubr.f32.mxu0 0.0
    %282 = vmatmul.mubr.f32.gmra.mrb[0].mxu0 %v130
    %v283 = vpop.f32.mrb[0].mxu0
    %v284 = vadd.f32 %v200, %v283
    %v285 = vpop.f32.mrb[0].mxu0
    %v286 = vadd.f32 %v204, %v285
    %287 = vdwg.mxu0
    %288 = vmatprep.subr.mxu0 %v134
    %289 = vmatpush1.msra.mxu0 %v133
    %290 = vmatprep.subr.mxu0 %v138
    %291 = vmatpush1.msra.mxu0 %v137
    %292 = vmatprep.subr.mxu0 %v142
    %293 = vmatpush1.msra.mxu0 %v141
    %294 = vmatprep.subr.mxu0 %v146
    %295 = vmatpush1.msra.mxu0 %v145
    %296 = vmatprep.subr.mxu0 %v150
    %297 = vmatpush1.msra.mxu0 %v149
    %298 = vmatprep.subr.mxu0 %v154
    %299 = vmatpush1.msra.mxu0 %v153
    %300 = vmatprep.subr.mxu0 %v158
    %301 = vmatpush1.msra.mxu0 %v157
    %302 = vmatprep.subr.mxu0 %v162
    %303 = vmatpush1.msra.mxu0 %v161
    %304 = vmatprep.subr.mxu0 %v166
    %305 = vmatpush1.msra.mxu0 %v165
    %306 = vmatprep.subr.mxu0 %v170
    %307 = vmatpush1.msra.mxu0 %v169
    %308 = vmatprep.subr.mxu0 %v174
    %309 = vmatpush1.msra.mxu0 %v173
    %310 = vmatprep.subr.mxu0 %v178
    %311 = vmatpush1.msra.mxu0 %v177
    %312 = vmatprep.subr.mxu0 %v182
    %313 = vmatpush1.msra.mxu0 %v181
    %314 = vmatprep.subr.mxu0 %v186
    %315 = vmatpush1.msra.mxu0 %v185
    %316 = vmatprep.subr.mxu0 %v190
    %317 = vmatpush1.msra.mxu0 %v189
    %318 = vmatprep.subr.mxu0 %v194
    %319 = vmatpush1.msra.mxu0 %v193
    %320 = vmatprep.subr.mxu0 0.0
    %321 = vmatpush1.msra.mxu0 0.0
    %322 = vmatprep.subr.mxu0 0.0
    %323 = vmatpush1.msra.mxu0 0.0
    %324 = vmatprep.subr.mxu0 0.0
    %325 = vmatpush1.msra.mxu0 0.0
    %326 = vmatprep.subr.mxu0 0.0
    %327 = vmatpush1.msra.mxu0 0.0
    %328 = vmatprep.subr.mxu0 0.0
    %329 = vmatpush1.msra.mxu0 0.0
    %330 = vmatprep.subr.mxu0 0.0
    %331 = vmatpush1.msra.mxu0 0.0
    %332 = vmatprep.subr.mxu0 0.0
    %333 = vmatpush1.msra.mxu0 0.0
    %334 = vmatprep.subr.mxu0 0.0
    %335 = vmatpush1.msra.mxu0 0.0
    %336 = vmatprep.subr.mxu0 0.0
    %337 = vmatpush1.msra.mxu0 0.0
    %338 = vmatprep.subr.mxu0 0.0
    %339 = vmatpush1.msra.mxu0 0.0
    %340 = vmatprep.subr.mxu0 0.0
    %341 = vmatpush1.msra.mxu0 0.0
    %342 = vmatprep.subr.mxu0 0.0
    %343 = vmatpush1.msra.mxu0 0.0
    %344 = vmatprep.subr.mxu0 0.0
    %345 = vmatpush1.msra.mxu0 0.0
    %346 = vmatprep.subr.mxu0 0.0
    %347 = vmatpush1.msra.mxu0 0.0
    %348 = vmatprep.subr.mxu0 0.0
    %349 = vmatpush1.msra.mxu0 0.0
    %350 = vmatprep.subr.mxu0 0.0
    %351 = vmatpush1.msra.mxu0 0.0
    %352 = vmatprep.mubr.f32.mxu0 0.0
    %353 = vmatmul.mubr.f32.gmra.mrb[0].mxu0 %v130
    %v354 = vpop.f32.mrb[0].mxu0
    %v355 = vadd.f32 %v208, %v354
    %v356 = vpop.f32.mrb[0].mxu0
    %v357 = vadd.f32 %v212, %v356
    %358 = vdwg.mxu0
    %vm359 = vcmp.gt.f32.partialorder %v284, 0.0
    %vm360 = vcmp.gt.f32.partialorder %v286, 0.0
    %vm361 = vcmp.gt.f32.partialorder %v355, 0.0
    %vm362 = vcmp.gt.f32.partialorder %v357, 0.0
    %v363 = vmul.f32 %v284, 0.01
    %v364 = vmul.f32 %v286, 0.01
    %v365 = vmul.f32 %v355, 0.01
    %v366 = vmul.f32 %v357, 0.01
    %v367 = vsel %vm359, %v284, %v363
    %v368 = vsel %vm360, %v286, %v364
    %v369 = vsel %vm361, %v355, %v365
    %v370 = vsel %vm362, %v357, %v366
    %v371 = vld [vmem:[#allocation11] sm:$0xff]
    %v372 = vld [vmem:[#allocation11 + $0x8] sm:$0xff]
    %v373 = vld [vmem:[#allocation11 + $0x10] sm:$0xff]
    %v374 = vld [vmem:[#allocation11 + $0x18] sm:$0xff]
    %v375 = vld [vmem:[#allocation11 + $0x20] sm:$0xff]
    %v376 = vld [vmem:[#allocation11 + $0x28] sm:$0xff]
    %v377 = vld [vmem:[#allocation11 + $0x30] sm:$0xff]
    %v378 = vld [vmem:[#allocation11 + $0x38] sm:$0xff]
    %v379 = vld [vmem:[#allocation11 + $0x40] sm:$0xff]
    %v380 = vld [vmem:[#allocation11 + $0x48] sm:$0xff]
    %v381 = vld [vmem:[#allocation11 + $0x50] sm:$0xff]
    %v382 = vld [vmem:[#allocation11 + $0x58] sm:$0xff]
    %v383 = vld [vmem:[#allocation11 + $0x60] sm:$0xff]
    %v384 = vld [vmem:[#allocation11 + $0x68] sm:$0xff]
    %v385 = vld [vmem:[#allocation11 + $0x70] sm:$0xff]
    %v386 = vld [vmem:[#allocation11 + $0x78] sm:$0xff]
    %v387 = vld [vmem:[#allocation11 + $0x80] sm:$0xff]
    %v388 = vld [vmem:[#allocation11 + $0x88] sm:$0xff]
    %v389 = vld [vmem:[#allocation11 + $0x90] sm:$0xff]
    %v390 = vld [vmem:[#allocation11 + $0x98] sm:$0xff]
    %v391 = vld [vmem:[#allocation11 + $0xa0] sm:$0xff]
    %v392 = vld [vmem:[#allocation11 + $0xa8] sm:$0xff]
    %v393 = vld [vmem:[#allocation11 + $0xb0] sm:$0xff]
    %v394 = vld [vmem:[#allocation11 + $0xb8] sm:$0xff]
    %v395 = vld [vmem:[#allocation11 + $0xc0] sm:$0xff]
    %v396 = vld [vmem:[#allocation11 + $0xc8] sm:$0xff]
    %v397 = vld [vmem:[#allocation11 + $0xd0] sm:$0xff]
    %v398 = vld [vmem:[#allocation11 + $0xd8] sm:$0xff]
    %v399 = vld [vmem:[#allocation11 + $0xe0] sm:$0xff]
    %v400 = vld [vmem:[#allocation11 + $0xe8] sm:$0xff]
    %v401 = vld [vmem:[#allocation11 + $0xf0] sm:$0xff]
    %v402 = vld [vmem:[#allocation11 + $0xf8] sm:$0xff]
    %v403 = vld [vmem:[#allocation11 + $0x100] sm:$0xff]
    %v404 = vld [vmem:[#allocation11 + $0x108] sm:$0xff]
    %v405 = vld [vmem:[#allocation11 + $0x110] sm:$0xff]
    %v406 = vld [vmem:[#allocation11 + $0x118] sm:$0xff]
    %v407 = vld [vmem:[#allocation11 + $0x120] sm:$0xff]
    %v408 = vld [vmem:[#allocation11 + $0x128] sm:$0xff]
    %v409 = vld [vmem:[#allocation11 + $0x130] sm:$0xff]
    %v410 = vld [vmem:[#allocation11 + $0x138] sm:$0xff]
    %v411 = vld [vmem:[#allocation11 + $0x140] sm:$0xff]
    %v412 = vld [vmem:[#allocation11 + $0x148] sm:$0xff]
    %v413 = vld [vmem:[#allocation11 + $0x150] sm:$0xff]
    %v414 = vld [vmem:[#allocation11 + $0x158] sm:$0xff]
    %v415 = vld [vmem:[#allocation11 + $0x160] sm:$0xff]
    %v416 = vld [vmem:[#allocation11 + $0x168] sm:$0xff]
    %v417 = vld [vmem:[#allocation11 + $0x170] sm:$0xff]
    %v418 = vld [vmem:[#allocation11 + $0x178] sm:$0xff]
    %v419 = vld [vmem:[#allocation11 + $0x180] sm:$0xff]
    %v420 = vld [vmem:[#allocation11 + $0x188] sm:$0xff]
    %v421 = vld [vmem:[#allocation11 + $0x190] sm:$0xff]
    %v422 = vld [vmem:[#allocation11 + $0x198] sm:$0xff]
    %v423 = vld [vmem:[#allocation11 + $0x1a0] sm:$0xff]
    %v424 = vld [vmem:[#allocation11 + $0x1a8] sm:$0xff]
    %v425 = vld [vmem:[#allocation11 + $0x1b0] sm:$0xff]
    %v426 = vld [vmem:[#allocation11 + $0x1b8] sm:$0xff]
    %v427 = vld [vmem:[#allocation11 + $0x1c0] sm:$0xff]
    %v428 = vld [vmem:[#allocation11 + $0x1c8] sm:$0xff]
    %v429 = vld [vmem:[#allocation11 + $0x1d0] sm:$0xff]
    %v430 = vld [vmem:[#allocation11 + $0x1d8] sm:$0xff]
    %v431 = vld [vmem:[#allocation11 + $0x1e0] sm:$0xff]
    %v432 = vld [vmem:[#allocation11 + $0x1e8] sm:$0xff]
    %v433 = vld [vmem:[#allocation11 + $0x1f0] sm:$0xff]
    %v434 = vld [vmem:[#allocation11 + $0x1f8] sm:$0xff]
    %v435 = vld [vmem:[%s7] sm:$0x1]
    %v437 = vlaneseq
    %v438 = vshrl.u32 %v437, 7
    %v439 = vsub.s32 0, %v438
    %v440 = vrot.slane %v435, %v439
    %442 = vmatprep.subr.mxu0 0.0
    %443 = vmatpush1.msra.mxu0 %v371
    %444 = vmatprep.subr.mxu0 0.0
    %445 = vmatpush1.msra.mxu0 %v372
    %446 = vmatprep.subr.mxu0 0.0
    %447 = vmatpush1.msra.mxu0 %v373
    %448 = vmatprep.subr.mxu0 0.0
    %449 = vmatpush1.msra.mxu0 %v374
    %450 = vmatprep.subr.mxu0 0.0
    %451 = vmatpush1.msra.mxu0 %v375
    %452 = vmatprep.subr.mxu0 0.0
    %453 = vmatpush1.msra.mxu0 %v376
    %454 = vmatprep.subr.mxu0 0.0
    %455 = vmatpush1.msra.mxu0 %v377
    %456 = vmatprep.subr.mxu0 0.0
    %457 = vmatpush1.msra.mxu0 %v378
    %458 = vmatprep.subr.mxu0 0.0
    %459 = vmatpush1.msra.mxu0 %v379
    %460 = vmatprep.subr.mxu0 0.0
    %461 = vmatpush1.msra.mxu0 %v380
    %462 = vmatprep.subr.mxu0 0.0
    %463 = vmatpush1.msra.mxu0 %v381
    %464 = vmatprep.subr.mxu0 0.0
    %465 = vmatpush1.msra.mxu0 %v382
    %466 = vmatprep.subr.mxu0 0.0
    %467 = vmatpush1.msra.mxu0 %v383
    %468 = vmatprep.subr.mxu0 0.0
    %469 = vmatpush1.msra.mxu0 %v384
    %470 = vmatprep.subr.mxu0 0.0
    %471 = vmatpush1.msra.mxu0 %v385
    %472 = vmatprep.subr.mxu0 0.0
    %473 = vmatpush1.msra.mxu0 %v386
    %474 = vmatprep.subr.mxu0 0.0
    %475 = vmatpush1.msra.mxu0 %v387
    %476 = vmatprep.subr.mxu0 0.0
    %477 = vmatpush1.msra.mxu0 %v388
    %478 = vmatprep.subr.mxu0 0.0
    %479 = vmatpush1.msra.mxu0 %v389
    %480 = vmatprep.subr.mxu0 0.0
    %481 = vmatpush1.msra.mxu0 %v390
    %482 = vmatprep.subr.mxu0 0.0
    %483 = vmatpush1.msra.mxu0 %v391
    %484 = vmatprep.subr.mxu0 0.0
    %485 = vmatpush1.msra.mxu0 %v392
    %486 = vmatprep.subr.mxu0 0.0
    %487 = vmatpush1.msra.mxu0 %v393
    %488 = vmatprep.subr.mxu0 0.0
    %489 = vmatpush1.msra.mxu0 %v394
    %490 = vmatprep.subr.mxu0 0.0
    %491 = vmatpush1.msra.mxu0 %v395
    %492 = vmatprep.subr.mxu0 0.0
    %493 = vmatpush1.msra.mxu0 %v396
    %494 = vmatprep.subr.mxu0 0.0
    %495 = vmatpush1.msra.mxu0 %v397
    %496 = vmatprep.subr.mxu0 0.0
    %497 = vmatpush1.msra.mxu0 %v398
    %498 = vmatprep.subr.mxu0 0.0
    %499 = vmatpush1.msra.mxu0 %v399
    %500 = vmatprep.subr.mxu0 0.0
    %501 = vmatpush1.msra.mxu0 %v400
    %502 = vmatprep.subr.mxu0 0.0
    %503 = vmatpush1.msra.mxu0 %v401
    %504 = vmatprep.subr.mxu0 0.0
    %505 = vmatpush1.msra.mxu0 %v402
    %506 = vmatprep.mubr.f32.mxu0 %v368
    %507 = vmatmul.mubr.f32.gmra.mrb[0].mxu0 %v367
    %v508 = vpop.f32.mrb[0].mxu0
    %v509 = vadd.f32 %v440, %v508
    %v510 = vpop.f32.mrb[0].mxu0
    %511 = vdwg.mxu0
    %512 = vmatprep.subr.mxu0 0.0
    %513 = vmatpush1.msra.mxu0 %v403
    %514 = vmatprep.subr.mxu0 0.0
    %515 = vmatpush1.msra.mxu0 %v404
    %516 = vmatprep.subr.mxu0 0.0
    %517 = vmatpush1.msra.mxu0 %v405
    %518 = vmatprep.subr.mxu0 0.0
    %519 = vmatpush1.msra.mxu0 %v406
    %520 = vmatprep.subr.mxu0 0.0
    %521 = vmatpush1.msra.mxu0 %v407
    %522 = vmatprep.subr.mxu0 0.0
    %523 = vmatpush1.msra.mxu0 %v408
    %524 = vmatprep.subr.mxu0 0.0
    %525 = vmatpush1.msra.mxu0 %v409
    %526 = vmatprep.subr.mxu0 0.0
    %527 = vmatpush1.msra.mxu0 %v410
    %528 = vmatprep.subr.mxu0 0.0
    %529 = vmatpush1.msra.mxu0 %v411
    %530 = vmatprep.subr.mxu0 0.0
    %531 = vmatpush1.msra.mxu0 %v412
    %532 = vmatprep.subr.mxu0 0.0
    %533 = vmatpush1.msra.mxu0 %v413
    %534 = vmatprep.subr.mxu0 0.0
    %535 = vmatpush1.msra.mxu0 %v414
    %536 = vmatprep.subr.mxu0 0.0
    %537 = vmatpush1.msra.mxu0 %v415
    %538 = vmatprep.subr.mxu0 0.0
    %539 = vmatpush1.msra.mxu0 %v416
    %540 = vmatprep.subr.mxu0 0.0
    %541 = vmatpush1.msra.mxu0 %v417
    %542 = vmatprep.subr.mxu0 0.0
    %543 = vmatpush1.msra.mxu0 %v418
    %544 = vmatprep.subr.mxu0 0.0
    %545 = vmatpush1.msra.mxu0 %v419
    %546 = vmatprep.subr.mxu0 0.0
    %547 = vmatpush1.msra.mxu0 %v420
    %548 = vmatprep.subr.mxu0 0.0
    %549 = vmatpush1.msra.mxu0 %v421
    %550 = vmatprep.subr.mxu0 0.0
    %551 = vmatpush1.msra.mxu0 %v422
    %552 = vmatprep.subr.mxu0 0.0
    %553 = vmatpush1.msra.mxu0 %v423
    %554 = vmatprep.subr.mxu0 0.0
    %555 = vmatpush1.msra.mxu0 %v424
    %556 = vmatprep.subr.mxu0 0.0
    %557 = vmatpush1.msra.mxu0 %v425
    %558 = vmatprep.subr.mxu0 0.0
    %559 = vmatpush1.msra.mxu0 %v426
    %560 = vmatprep.subr.mxu0 0.0
    %561 = vmatpush1.msra.mxu0 %v427
    %562 = vmatprep.subr.mxu0 0.0
    %563 = vmatpush1.msra.mxu0 %v428
    %564 = vmatprep.subr.mxu0 0.0
    %565 = vmatpush1.msra.mxu0 %v429
    %566 = vmatprep.subr.mxu0 0.0
    %567 = vmatpush1.msra.mxu0 %v430
    %568 = vmatprep.subr.mxu0 0.0
    %569 = vmatpush1.msra.mxu0 %v431
    %570 = vmatprep.subr.mxu0 0.0
    %571 = vmatpush1.msra.mxu0 %v432
    %572 = vmatprep.subr.mxu0 0.0
    %573 = vmatpush1.msra.mxu0 %v433
    %574 = vmatprep.subr.mxu0 0.0
    %575 = vmatpush1.msra.mxu0 %v434
    %576 = vmatprep.mubr.f32.mxu0 %v370
    %577 = vmatmul.mubr.f32.gmra.mrb[0].mxu0 %v369
    %v578 = vpop.f32.mrb[0].mxu0
    %v579 = vadd.f32 %v509, %v578
    %v580 = vpop.f32.mrb[0].mxu0
    %581 = vdwg.mxu0
    %v582 = vld [vmem:[#allocation12] sm:$0xff]
    %v583 = vld [vmem:[#allocation12 + $0x8] sm:$0xff]
    %v584 = vld [vmem:[#allocation12 + $0x10] sm:$0xff]
    %v585 = vld [vmem:[#allocation12 + $0x18] sm:$0xff]
    %v586 = vld [vmem:[#allocation12 + $0x20] sm:$0xff]
    %v587 = vld [vmem:[#allocation12 + $0x28] sm:$0xff]
    %v588 = vld [vmem:[#allocation12 + $0x30] sm:$0xff]
    %v589 = vld [vmem:[#allocation12 + $0x38] sm:$0xff]
    %v590 = vld [vmem:[#allocation12 + $0x40] sm:$0xff]
    %v591 = vld [vmem:[#allocation12 + $0x48] sm:$0xff]
    %v592 = vld [vmem:[#allocation12 + $0x50] sm:$0xff]
    %v593 = vld [vmem:[#allocation12 + $0x58] sm:$0xff]
    %v594 = vld [vmem:[#allocation12 + $0x60] sm:$0xff]
    %v595 = vld [vmem:[#allocation12 + $0x68] sm:$0xff]
    %v596 = vld [vmem:[#allocation12 + $0x70] sm:$0xff]
    %v597 = vld [vmem:[#allocation12 + $0x78] sm:$0xff]
    %v598 = vld [vmem:[#allocation8] sm:$0xff]
    %v599 = vld [vmem:[#allocation6] sm:$0xff]
    %v600 = vadd.f32 %v579, %v599
    %601 = vmatprep.subr.mxu0 0.0
    %602 = vmatpush1.msra.mxu0 %v582
    %603 = vmatprep.subr.mxu0 0.0
    %604 = vmatpush1.msra.mxu0 %v583
    %605 = vmatprep.subr.mxu0 0.0
    %606 = vmatpush1.msra.mxu0 %v584
    %607 = vmatprep.subr.mxu0 0.0
    %608 = vmatpush1.msra.mxu0 %v585
    %609 = vmatprep.subr.mxu0 0.0
    %610 = vmatpush1.msra.mxu0 %v586
    %611 = vmatprep.subr.mxu0 0.0
    %612 = vmatpush1.msra.mxu0 %v587
    %613 = vmatprep.subr.mxu0 0.0
    %614 = vmatpush1.msra.mxu0 %v588
    %615 = vmatprep.subr.mxu0 0.0
    %616 = vmatpush1.msra.mxu0 %v589
    %617 = vmatprep.subr.mxu0 0.0
    %618 = vmatpush1.msra.mxu0 %v590
    %619 = vmatprep.subr.mxu0 0.0
    %620 = vmatpush1.msra.mxu0 %v591
    %621 = vmatprep.subr.mxu0 0.0
    %622 = vmatpush1.msra.mxu0 %v592
    %623 = vmatprep.subr.mxu0 0.0
    %624 = vmatpush1.msra.mxu0 %v593
    %625 = vmatprep.subr.mxu0 0.0
    %626 = vmatpush1.msra.mxu0 %v594
    %627 = vmatprep.subr.mxu0 0.0
    %628 = vmatpush1.msra.mxu0 %v595
    %629 = vmatprep.subr.mxu0 0.0
    %630 = vmatpush1.msra.mxu0 %v596
    %631 = vmatprep.subr.mxu0 0.0
    %632 = vmatpush1.msra.mxu0 %v597
    %633 = vmatprep.subr.mxu0 0.0
    %634 = vmatpush1.msra.mxu0 0.0
    %635 = vmatprep.subr.mxu0 0.0
    %636 = vmatpush1.msra.mxu0 0.0
    %637 = vmatprep.subr.mxu0 0.0
    %638 = vmatpush1.msra.mxu0 0.0
    %639 = vmatprep.subr.mxu0 0.0
    %640 = vmatpush1.msra.mxu0 0.0
    %641 = vmatprep.subr.mxu0 0.0
    %642 = vmatpush1.msra.mxu0 0.0
    %643 = vmatprep.subr.mxu0 0.0
    %644 = vmatpush1.msra.mxu0 0.0
    %645 = vmatprep.subr.mxu0 0.0
    %646 = vmatpush1.msra.mxu0 0.0
    %647 = vmatprep.subr.mxu0 0.0
    %648 = vmatpush1.msra.mxu0 0.0
    %649 = vmatprep.subr.mxu0 0.0
    %650 = vmatpush1.msra.mxu0 0.0
    %651 = vmatprep.subr.mxu0 0.0
    %652 = vmatpush1.msra.mxu0 0.0
    %653 = vmatprep.subr.mxu0 0.0
    %654 = vmatpush1.msra.mxu0 0.0
    %655 = vmatprep.subr.mxu0 0.0
    %656 = vmatpush1.msra.mxu0 0.0
    %657 = vmatprep.subr.mxu0 0.0
    %658 = vmatpush1.msra.mxu0 0.0
    %659 = vmatprep.subr.mxu0 0.0
    %660 = vmatpush1.msra.mxu0 0.0
    %661 = vmatprep.subr.mxu0 0.0
    %662 = vmatpush1.msra.mxu0 0.0
    %663 = vmatprep.subr.mxu0 0.0
    %664 = vmatpush1.msra.mxu0 0.0
    %665 = vmatprep.mubr.f32.mxu0 0.0
    %666 = vmatmul.mubr.f32.gmra.mrb[0].mxu0 %v598
    %v667 = vpop.f32.mrb[0].mxu0
    %v668 = vadd.f32 0.0, %v667
    %v669 = vpop.f32.mrb[0].mxu0
    %670 = vdwg.mxu0
    %v671 = vadd.f32 %v600, %v668
    %v672 = vtanh.pop %v671
    %673 = vst [vmem:[#allocation2] sm:$0xff] %v672
    %v674 = vld [vmem:[#allocation6 + $0x8] sm:$0xff]
    %v675 = vadd.f32 %v579, %v674
    %676 = vmatprep.subr.mxu0 0.0
    %677 = vmatpush1.msra.mxu0 %v582
    %678 = vmatprep.subr.mxu0 0.0
    %679 = vmatpush1.msra.mxu0 %v583
    %680 = vmatprep.subr.mxu0 0.0
    %681 = vmatpush1.msra.mxu0 %v584
    %682 = vmatprep.subr.mxu0 0.0
    %683 = vmatpush1.msra.mxu0 %v585
    %684 = vmatprep.subr.mxu0 0.0
    %685 = vmatpush1.msra.mxu0 %v586
    %686 = vmatprep.subr.mxu0 0.0
    %687 = vmatpush1.msra.mxu0 %v587
    %688 = vmatprep.subr.mxu0 0.0
    %689 = vmatpush1.msra.mxu0 %v588
    %690 = vmatprep.subr.mxu0 0.0
    %691 = vmatpush1.msra.mxu0 %v589
    %692 = vmatprep.subr.mxu0 0.0
    %693 = vmatpush1.msra.mxu0 %v590
    %694 = vmatprep.subr.mxu0 0.0
    %695 = vmatpush1.msra.mxu0 %v591
    %696 = vmatprep.subr.mxu0 0.0
    %697 = vmatpush1.msra.mxu0 %v592
    %698 = vmatprep.subr.mxu0 0.0
    %699 = vmatpush1.msra.mxu0 %v593
    %700 = vmatprep.subr.mxu0 0.0
    %701 = vmatpush1.msra.mxu0 %v594
    %702 = vmatprep.subr.mxu0 0.0
    %703 = vmatpush1.msra.mxu0 %v595
    %704 = vmatprep.subr.mxu0 0.0
    %705 = vmatpush1.msra.mxu0 %v596
    %706 = vmatprep.subr.mxu0 0.0
    %707 = vmatpush1.msra.mxu0 %v597
    %708 = vmatprep.subr.mxu0 0.0
    %709 = vmatpush1.msra.mxu0 0.0
    %710 = vmatprep.subr.mxu0 0.0
    %711 = vmatpush1.msra.mxu0 0.0
    %712 = vmatprep.subr.mxu0 0.0
    %713 = vmatpush1.msra.mxu0 0.0
    %714 = vmatprep.subr.mxu0 0.0
    %715 = vmatpush1.msra.mxu0 0.0
    %716 = vmatprep.subr.mxu0 0.0
    %717 = vmatpush1.msra.mxu0 0.0
    %718 = vmatprep.subr.mxu0 0.0
    %719 = vmatpush1.msra.mxu0 0.0
    %720 = vmatprep.subr.mxu0 0.0
    %721 = vmatpush1.msra.mxu0 0.0
    %722 = vmatprep.subr.mxu0 0.0
    %723 = vmatpush1.msra.mxu0 0.0
    %724 = vmatprep.subr.mxu0 0.0
    %725 = vmatpush1.msra.mxu0 0.0
    %726 = vmatprep.subr.mxu0 0.0
    %727 = vmatpush1.msra.mxu0 0.0
    %728 = vmatprep.subr.mxu0 0.0
    %729 = vmatpush1.msra.mxu0 0.0
    %730 = vmatprep.subr.mxu0 0.0
    %731 = vmatpush1.msra.mxu0 0.0
    %732 = vmatprep.subr.mxu0 0.0
    %733 = vmatpush1.msra.mxu0 0.0
    %734 = vmatprep.subr.mxu0 0.0
    %735 = vmatpush1.msra.mxu0 0.0
    %736 = vmatprep.subr.mxu0 0.0
    %737 = vmatpush1.msra.mxu0 0.0
    %738 = vmatprep.subr.mxu0 0.0
    %739 = vmatpush1.msra.mxu0 0.0
    %740 = vmatprep.mubr.f32.mxu0 0.0
    %741 = vmatmul.mubr.f32.gmra.mrb[0].mxu0 %v672
    %v742 = vpop.f32.mrb[0].mxu0
    %v743 = vadd.f32 0.0, %v742
    %v744 = vpop.f32.mrb[0].mxu0
    %745 = vdwg.mxu0
    %v746 = vadd.f32 %v675, %v743
    %v747 = vtanh.pop %v746
    %748 = vst [vmem:[#allocation2 + $0x8] sm:$0xff] %v747
    %v749 = vld [vmem:[#allocation6 + $0x10] sm:$0xff]
    %v750 = vadd.f32 %v579, %v749
    %751 = vmatprep.subr.mxu0 0.0
    %752 = vmatpush1.msra.mxu0 %v582
    %753 = vmatprep.subr.mxu0 0.0
    %754 = vmatpush1.msra.mxu0 %v583
    %755 = vmatprep.subr.mxu0 0.0
    %756 = vmatpush1.msra.mxu0 %v584
    %757 = vmatprep.subr.mxu0 0.0
    %758 = vmatpush1.msra.mxu0 %v585
    %759 = vmatprep.subr.mxu0 0.0
    %760 = vmatpush1.msra.mxu0 %v586
    %761 = vmatprep.subr.mxu0 0.0
    %762 = vmatpush1.msra.mxu0 %v587
    %763 = vmatprep.subr.mxu0 0.0
    %764 = vmatpush1.msra.mxu0 %v588
    %765 = vmatprep.subr.mxu0 0.0
    %766 = vmatpush1.msra.mxu0 %v589
    %767 = vmatprep.subr.mxu0 0.0
    %768 = vmatpush1.msra.mxu0 %v590
    %769 = vmatprep.subr.mxu0 0.0
    %770 = vmatpush1.msra.mxu0 %v591
    %771 = vmatprep.subr.mxu0 0.0
    %772 = vmatpush1.msra.mxu0 %v592
    %773 = vmatprep.subr.mxu0 0.0
    %774 = vmatpush1.msra.mxu0 %v593
    %775 = vmatprep.subr.mxu0 0.0
    %776 = vmatpush1.msra.mxu0 %v594
    %777 = vmatprep.subr.mxu0 0.0
    %778 = vmatpush1.msra.mxu0 %v595
    %779 = vmatprep.subr.mxu0 0.0
    %780 = vmatpush1.msra.mxu0 %v596
    %781 = vmatprep.subr.mxu0 0.0
    %782 = vmatpush1.msra.mxu0 %v597
    %783 = vmatprep.subr.mxu0 0.0
    %784 = vmatpush1.msra.mxu0 0.0
    %785 = vmatprep.subr.mxu0 0.0
    %786 = vmatpush1.msra.mxu0 0.0
    %787 = vmatprep.subr.mxu0 0.0
    %788 = vmatpush1.msra.mxu0 0.0
    %789 = vmatprep.subr.mxu0 0.0
    %790 = vmatpush1.msra.mxu0 0.0
    %791 = vmatprep.subr.mxu0 0.0
    %792 = vmatpush1.msra.mxu0 0.0
    %793 = vmatprep.subr.mxu0 0.0
    %794 = vmatpush1.msra.mxu0 0.0
    %795 = vmatprep.subr.mxu0 0.0
    %796 = vmatpush1.msra.mxu0 0.0
    %797 = vmatprep.subr.mxu0 0.0
    %798 = vmatpush1.msra.mxu0 0.0
    %799 = vmatprep.subr.mxu0 0.0
    %800 = vmatpush1.msra.mxu0 0.0
    %801 = vmatprep.subr.mxu0 0.0
    %802 = vmatpush1.msra.mxu0 0.0
    %803 = vmatprep.subr.mxu0 0.0
    %804 = vmatpush1.msra.mxu0 0.0
    %805 = vmatprep.subr.mxu0 0.0
    %806 = vmatpush1.msra.mxu0 0.0
    %807 = vmatprep.subr.mxu0 0.0
    %808 = vmatpush1.msra.mxu0 0.0
    %809 = vmatprep.subr.mxu0 0.0
    %810 = vmatpush1.msra.mxu0 0.0
    %811 = vmatprep.subr.mxu0 0.0
    %812 = vmatpush1.msra.mxu0 0.0
    %813 = vmatprep.subr.mxu0 0.0
    %814 = vmatpush1.msra.mxu0 0.0
    %815 = vmatprep.mubr.f32.mxu0 0.0
    %816 = vmatmul.mubr.f32.gmra.mrb[0].mxu0 %v747
    %v817 = vpop.f32.mrb[0].mxu0
    %v818 = vadd.f32 0.0, %v817
    %v819 = vpop.f32.mrb[0].mxu0
    %820 = vdwg.mxu0
    %v821 = vadd.f32 %v750, %v818
    %v822 = vtanh.pop %v821
    %823 = vst [vmem:[#allocation2 + $0x10] sm:$0xff] %v822
    %v824 = vld [vmem:[#allocation6 + $0x18] sm:$0xff]
    %v825 = vadd.f32 %v579, %v824
    %826 = vmatprep.subr.mxu0 0.0
    %827 = vmatpush1.msra.mxu0 %v582
    %828 = vmatprep.subr.mxu0 0.0
    %829 = vmatpush1.msra.mxu0 %v583
    %830 = vmatprep.subr.mxu0 0.0
    %831 = vmatpush1.msra.mxu0 %v584
    %832 = vmatprep.subr.mxu0 0.0
    %833 = vmatpush1.msra.mxu0 %v585
    %834 = vmatprep.subr.mxu0 0.0
    %835 = vmatpush1.msra.mxu0 %v586
    %836 = vmatprep.subr.mxu0 0.0
    %837 = vmatpush1.msra.mxu0 %v587
    %838 = vmatprep.subr.mxu0 0.0
    %839 = vmatpush1.msra.mxu0 %v588
    %840 = vmatprep.subr.mxu0 0.0
    %841 = vmatpush1.msra.mxu0 %v589
    %842 = vmatprep.subr.mxu0 0.0
    %843 = vmatpush1.msra.mxu0 %v590
    %844 = vmatprep.subr.mxu0 0.0
    %845 = vmatpush1.msra.mxu0 %v591
    %846 = vmatprep.subr.mxu0 0.0
    %847 = vmatpush1.msra.mxu0 %v592
    %848 = vmatprep.subr.mxu0 0.0
    %849 = vmatpush1.msra.mxu0 %v593
    %850 = vmatprep.subr.mxu0 0.0
    %851 = vmatpush1.msra.mxu0 %v594
    %852 = vmatprep.subr.mxu0 0.0
    %853 = vmatpush1.msra.mxu0 %v595
    %854 = vmatprep.subr.mxu0 0.0
    %855 = vmatpush1.msra.mxu0 %v596
    %856 = vmatprep.subr.mxu0 0.0
    %857 = vmatpush1.msra.mxu0 %v597
    %858 = vmatprep.subr.mxu0 0.0
    %859 = vmatpush1.msra.mxu0 0.0
    %860 = vmatprep.subr.mxu0 0.0
    %861 = vmatpush1.msra.mxu0 0.0
    %862 = vmatprep.subr.mxu0 0.0
    %863 = vmatpush1.msra.mxu0 0.0
    %864 = vmatprep.subr.mxu0 0.0
    %865 = vmatpush1.msra.mxu0 0.0
    %866 = vmatprep.subr.mxu0 0.0
    %867 = vmatpush1.msra.mxu0 0.0
    %868 = vmatprep.subr.mxu0 0.0
    %869 = vmatpush1.msra.mxu0 0.0
    %870 = vmatprep.subr.mxu0 0.0
    %871 = vmatpush1.msra.mxu0 0.0
    %872 = vmatprep.subr.mxu0 0.0
    %873 = vmatpush1.msra.mxu0 0.0
    %874 = vmatprep.subr.mxu0 0.0
    %875 = vmatpush1.msra.mxu0 0.0
    %876 = vmatprep.subr.mxu0 0.0
    %877 = vmatpush1.msra.mxu0 0.0
    %878 = vmatprep.subr.mxu0 0.0
    %879 = vmatpush1.msra.mxu0 0.0
    %880 = vmatprep.subr.mxu0 0.0
    %881 = vmatpush1.msra.mxu0 0.0
    %882 = vmatprep.subr.mxu0 0.0
    %883 = vmatpush1.msra.mxu0 0.0
    %884 = vmatprep.subr.mxu0 0.0
    %885 = vmatpush1.msra.mxu0 0.0
    %886 = vmatprep.subr.mxu0 0.0
    %887 = vmatpush1.msra.mxu0 0.0
    %888 = vmatprep.subr.mxu0 0.0
    %889 = vmatpush1.msra.mxu0 0.0
    %890 = vmatprep.mubr.f32.mxu0 0.0
    %891 = vmatmul.mubr.f32.gmra.mrb[0].mxu0 %v822
    %v892 = vpop.f32.mrb[0].mxu0
    %v893 = vadd.f32 0.0, %v892
    %v894 = vpop.f32.mrb[0].mxu0
    %895 = vdwg.mxu0
    %v896 = vadd.f32 %v825, %v893
    %v897 = vtanh.pop %v896
    %898 = vst [vmem:[#allocation2 + $0x18] sm:$0xff] %v897
    %v899 = vld [vmem:[#allocation6 + $0x20] sm:$0xff]
    %v900 = vadd.f32 %v579, %v899
    %901 = vmatprep.subr.mxu0 0.0
    %902 = vmatpush1.msra.mxu0 %v582
    %903 = vmatprep.subr.mxu0 0.0
    %904 = vmatpush1.msra.mxu0 %v583
    %905 = vmatprep.subr.mxu0 0.0
    %906 = vmatpush1.msra.mxu0 %v584
    %907 = vmatprep.subr.mxu0 0.0
    %908 = vmatpush1.msra.mxu0 %v585
    %909 = vmatprep.subr.mxu0 0.0
    %910 = vmatpush1.msra.mxu0 %v586
    %911 = vmatprep.subr.mxu0 0.0
    %912 = vmatpush1.msra.mxu0 %v587
    %913 = vmatprep.subr.mxu0 0.0
    %914 = vmatpush1.msra.mxu0 %v588
    %915 = vmatprep.subr.mxu0 0.0
    %916 = vmatpush1.msra.mxu0 %v589
    %917 = vmatprep.subr.mxu0 0.0
    %918 = vmatpush1.msra.mxu0 %v590
    %919 = vmatprep.subr.mxu0 0.0
    %920 = vmatpush1.msra.mxu0 %v591
    %921 = vmatprep.subr.mxu0 0.0
    %922 = vmatpush1.msra.mxu0 %v592
    %923 = vmatprep.subr.mxu0 0.0
    %924 = vmatpush1.msra.mxu0 %v593
    %925 = vmatprep.subr.mxu0 0.0
    %926 = vmatpush1.msra.mxu0 %v594
    %927 = vmatprep.subr.mxu0 0.0
    %928 = vmatpush1.msra.mxu0 %v595
    %929 = vmatprep.subr.mxu0 0.0
    %930 = vmatpush1.msra.mxu0 %v596
    %931 = vmatprep.subr.mxu0 0.0
    %932 = vmatpush1.msra.mxu0 %v597
    %933 = vmatprep.subr.mxu0 0.0
    %934 = vmatpush1.msra.mxu0 0.0
    %935 = vmatprep.subr.mxu0 0.0
    %936 = vmatpush1.msra.mxu0 0.0
    %937 = vmatprep.subr.mxu0 0.0
    %938 = vmatpush1.msra.mxu0 0.0
    %939 = vmatprep.subr.mxu0 0.0
    %940 = vmatpush1.msra.mxu0 0.0
    %941 = vmatprep.subr.mxu0 0.0
    %942 = vmatpush1.msra.mxu0 0.0
    %943 = vmatprep.subr.mxu0 0.0
    %944 = vmatpush1.msra.mxu0 0.0
    %945 = vmatprep.subr.mxu0 0.0
    %946 = vmatpush1.msra.mxu0 0.0
    %947 = vmatprep.subr.mxu0 0.0
    %948 = vmatpush1.msra.mxu0 0.0
    %949 = vmatprep.subr.mxu0 0.0
    %950 = vmatpush1.msra.mxu0 0.0
    %951 = vmatprep.subr.mxu0 0.0
    %952 = vmatpush1.msra.mxu0 0.0
    %953 = vmatprep.subr.mxu0 0.0
    %954 = vmatpush1.msra.mxu0 0.0
    %955 = vmatprep.subr.mxu0 0.0
    %956 = vmatpush1.msra.mxu0 0.0
    %957 = vmatprep.subr.mxu0 0.0
    %958 = vmatpush1.msra.mxu0 0.0
    %959 = vmatprep.subr.mxu0 0.0
    %960 = vmatpush1.msra.mxu0 0.0
    %961 = vmatprep.subr.mxu0 0.0
    %962 = vmatpush1.msra.mxu0 0.0
    %963 = vmatprep.subr.mxu0 0.0
    %964 = vmatpush1.msra.mxu0 0.0
    %965 = vmatprep.mubr.f32.mxu0 0.0
    %966 = vmatmul.mubr.f32.gmra.mrb[0].mxu0 %v897
    %v967 = vpop.f32.mrb[0].mxu0
    %v968 = vadd.f32 0.0, %v967
    %v969 = vpop.f32.mrb[0].mxu0
    %970 = vdwg.mxu0
    %v971 = vadd.f32 %v900, %v968
    %v972 = vtanh.pop %v971
    %973 = vst [vmem:[#allocation2 + $0x20] sm:$0xff] %v972
    %v974 = vld [vmem:[#allocation6 + $0x28] sm:$0xff]
    %v975 = vadd.f32 %v579, %v974
    %976 = vmatprep.subr.mxu0 0.0
    %977 = vmatpush1.msra.mxu0 %v582
    %978 = vmatprep.subr.mxu0 0.0
    %979 = vmatpush1.msra.mxu0 %v583
    %980 = vmatprep.subr.mxu0 0.0
    %981 = vmatpush1.msra.mxu0 %v584
    %982 = vmatprep.subr.mxu0 0.0
    %983 = vmatpush1.msra.mxu0 %v585
    %984 = vmatprep.subr.mxu0 0.0
    %985 = vmatpush1.msra.mxu0 %v586
    %986 = vmatprep.subr.mxu0 0.0
    %987 = vmatpush1.msra.mxu0 %v587
    %988 = vmatprep.subr.mxu0 0.0
    %989 = vmatpush1.msra.mxu0 %v588
    %990 = vmatprep.subr.mxu0 0.0
    %991 = vmatpush1.msra.mxu0 %v589
    %992 = vmatprep.subr.mxu0 0.0
    %993 = vmatpush1.msra.mxu0 %v590
    %994 = vmatprep.subr.mxu0 0.0
    %995 = vmatpush1.msra.mxu0 %v591
    %996 = vmatprep.subr.mxu0 0.0
    %997 = vmatpush1.msra.mxu0 %v592
    %998 = vmatprep.subr.mxu0 0.0
    %999 = vmatpush1.msra.mxu0 %v593
    %1000 = vmatprep.subr.mxu0 0.0
    %1001 = vmatpush1.msra.mxu0 %v594
    %1002 = vmatprep.subr.mxu0 0.0
    %1003 = vmatpush1.msra.mxu0 %v595
    %1004 = vmatprep.subr.mxu0 0.0
    %1005 = vmatpush1.msra.mxu0 %v596
    %1006 = vmatprep.subr.mxu0 0.0
    %1007 = vmatpush1.msra.mxu0 %v597
    %1008 = vmatprep.subr.mxu0 0.0
    %1009 = vmatpush1.msra.mxu0 0.0
    %1010 = vmatprep.subr.mxu0 0.0
    %1011 = vmatpush1.msra.mxu0 0.0
    %1012 = vmatprep.subr.mxu0 0.0
    %1013 = vmatpush1.msra.mxu0 0.0
    %1014 = vmatprep.subr.mxu0 0.0
    %1015 = vmatpush1.msra.mxu0 0.0
    %1016 = vmatprep.subr.mxu0 0.0
    %1017 = vmatpush1.msra.mxu0 0.0
    %1018 = vmatprep.subr.mxu0 0.0
    %1019 = vmatpush1.msra.mxu0 0.0
    %1020 = vmatprep.subr.mxu0 0.0
    %1021 = vmatpush1.msra.mxu0 0.0
    %1022 = vmatprep.subr.mxu0 0.0
    %1023 = vmatpush1.msra.mxu0 0.0
    %1024 = vmatprep.subr.mxu0 0.0
    %1025 = vmatpush1.msra.mxu0 0.0
    %1026 = vmatprep.subr.mxu0 0.0
    %1027 = vmatpush1.msra.mxu0 0.0
    %1028 = vmatprep.subr.mxu0 0.0
    %1029 = vmatpush1.msra.mxu0 0.0
    %1030 = vmatprep.subr.mxu0 0.0
    %1031 = vmatpush1.msra.mxu0 0.0
    %1032 = vmatprep.subr.mxu0 0.0
    %1033 = vmatpush1.msra.mxu0 0.0
    %1034 = vmatprep.subr.mxu0 0.0
    %1035 = vmatpush1.msra.mxu0 0.0
    %1036 = vmatprep.subr.mxu0 0.0
    %1037 = vmatpush1.msra.mxu0 0.0
    %1038 = vmatprep.subr.mxu0 0.0
    %1039 = vmatpush1.msra.mxu0 0.0
    %1040 = vmatprep.mubr.f32.mxu0 0.0
    %1041 = vmatmul.mubr.f32.gmra.mrb[0].mxu0 %v972
    %v1042 = vpop.f32.mrb[0].mxu0
    %v1043 = vadd.f32 0.0, %v1042
    %v1044 = vpop.f32.mrb[0].mxu0
    %1045 = vdwg.mxu0
    %v1046 = vadd.f32 %v975, %v1043
    %v1047 = vtanh.pop %v1046
    %1048 = vst [vmem:[#allocation2 + $0x28] sm:$0xff] %v1047
    %v1049 = vld [vmem:[#allocation6 + $0x30] sm:$0xff]
    %v1050 = vadd.f32 %v579, %v1049
    %1051 = vmatprep.subr.mxu0 0.0
    %1052 = vmatpush1.msra.mxu0 %v582
    %1053 = vmatprep.subr.mxu0 0.0
    %1054 = vmatpush1.msra.mxu0 %v583
    %1055 = vmatprep.subr.mxu0 0.0
    %1056 = vmatpush1.msra.mxu0 %v584
    %1057 = vmatprep.subr.mxu0 0.0
    %1058 = vmatpush1.msra.mxu0 %v585
    %1059 = vmatprep.subr.mxu0 0.0
    %1060 = vmatpush1.msra.mxu0 %v586
    %1061 = vmatprep.subr.mxu0 0.0
    %1062 = vmatpush1.msra.mxu0 %v587
    %1063 = vmatprep.subr.mxu0 0.0
    %1064 = vmatpush1.msra.mxu0 %v588
    %1065 = vmatprep.subr.mxu0 0.0
    %1066 = vmatpush1.msra.mxu0 %v589
    %1067 = vmatprep.subr.mxu0 0.0
    %1068 = vmatpush1.msra.mxu0 %v590
    %1069 = vmatprep.subr.mxu0 0.0
    %1070 = vmatpush1.msra.mxu0 %v591
    %1071 = vmatprep.subr.mxu0 0.0
    %1072 = vmatpush1.msra.mxu0 %v592
    %1073 = vmatprep.subr.mxu0 0.0
    %1074 = vmatpush1.msra.mxu0 %v593
    %1075 = vmatprep.subr.mxu0 0.0
    %1076 = vmatpush1.msra.mxu0 %v594
    %1077 = vmatprep.subr.mxu0 0.0
    %1078 = vmatpush1.msra.mxu0 %v595
    %1079 = vmatprep.subr.mxu0 0.0
    %1080 = vmatpush1.msra.mxu0 %v596
    %1081 = vmatprep.subr.mxu0 0.0
    %1082 = vmatpush1.msra.mxu0 %v597
    %1083 = vmatprep.subr.mxu0 0.0
    %1084 = vmatpush1.msra.mxu0 0.0
    %1085 = vmatprep.subr.mxu0 0.0
    %1086 = vmatpush1.msra.mxu0 0.0
    %1087 = vmatprep.subr.mxu0 0.0
    %1088 = vmatpush1.msra.mxu0 0.0
    %1089 = vmatprep.subr.mxu0 0.0
    %1090 = vmatpush1.msra.mxu0 0.0
    %1091 = vmatprep.subr.mxu0 0.0
    %1092 = vmatpush1.msra.mxu0 0.0
    %1093 = vmatprep.subr.mxu0 0.0
    %1094 = vmatpush1.msra.mxu0 0.0
    %1095 = vmatprep.subr.mxu0 0.0
    %1096 = vmatpush1.msra.mxu0 0.0
    %1097 = vmatprep.subr.mxu0 0.0
    %1098 = vmatpush1.msra.mxu0 0.0
    %1099 = vmatprep.subr.mxu0 0.0
    %1100 = vmatpush1.msra.mxu0 0.0
    %1101 = vmatprep.subr.mxu0 0.0
    %1102 = vmatpush1.msra.mxu0 0.0
    %1103 = vmatprep.subr.mxu0 0.0
    %1104 = vmatpush1.msra.mxu0 0.0
    %1105 = vmatprep.subr.mxu0 0.0
    %1106 = vmatpush1.msra.mxu0 0.0
    %1107 = vmatprep.subr.mxu0 0.0
    %1108 = vmatpush1.msra.mxu0 0.0
    %1109 = vmatprep.subr.mxu0 0.0
    %1110 = vmatpush1.msra.mxu0 0.0
    %1111 = vmatprep.subr.mxu0 0.0
    %1112 = vmatpush1.msra.mxu0 0.0
    %1113 = vmatprep.subr.mxu0 0.0
    %1114 = vmatpush1.msra.mxu0 0.0
    %1115 = vmatprep.mubr.f32.mxu0 0.0
    %1116 = vmatmul.mubr.f32.gmra.mrb[0].mxu0 %v1047
    %v1117 = vpop.f32.mrb[0].mxu0
    %v1118 = vadd.f32 0.0, %v1117
    %v1119 = vpop.f32.mrb[0].mxu0
    %1120 = vdwg.mxu0
    %v1121 = vadd.f32 %v1050, %v1118
    %v1122 = vtanh.pop %v1121
    %1123 = vst [vmem:[#allocation2 + $0x30] sm:$0xff] %v1122
    %v1124 = vld [vmem:[#allocation6 + $0x38] sm:$0xff]
    %v1125 = vadd.f32 %v579, %v1124
    %1126 = vmatprep.subr.mxu0 0.0
    %1127 = vmatpush1.msra.mxu0 %v582
    %1128 = vmatprep.subr.mxu0 0.0
    %1129 = vmatpush1.msra.mxu0 %v583
    %1130 = vmatprep.subr.mxu0 0.0
    %1131 = vmatpush1.msra.mxu0 %v584
    %1132 = vmatprep.subr.mxu0 0.0
    %1133 = vmatpush1.msra.mxu0 %v585
    %1134 = vmatprep.subr.mxu0 0.0
    %1135 = vmatpush1.msra.mxu0 %v586
    %1136 = vmatprep.subr.mxu0 0.0
    %1137 = vmatpush1.msra.mxu0 %v587
    %1138 = vmatprep.subr.mxu0 0.0
    %1139 = vmatpush1.msra.mxu0 %v588
    %1140 = vmatprep.subr.mxu0 0.0
    %1141 = vmatpush1.msra.mxu0 %v589
    %1142 = vmatprep.subr.mxu0 0.0
    %1143 = vmatpush1.msra.mxu0 %v590
    %1144 = vmatprep.subr.mxu0 0.0
    %1145 = vmatpush1.msra.mxu0 %v591
    %1146 = vmatprep.subr.mxu0 0.0
    %1147 = vmatpush1.msra.mxu0 %v592
    %1148 = vmatprep.subr.mxu0 0.0
    %1149 = vmatpush1.msra.mxu0 %v593
    %1150 = vmatprep.subr.mxu0 0.0
    %1151 = vmatpush1.msra.mxu0 %v594
    %1152 = vmatprep.subr.mxu0 0.0
    %1153 = vmatpush1.msra.mxu0 %v595
    %1154 = vmatprep.subr.mxu0 0.0
    %1155 = vmatpush1.msra.mxu0 %v596
    %1156 = vmatprep.subr.mxu0 0.0
    %1157 = vmatpush1.msra.mxu0 %v597
    %1158 = vmatprep.subr.mxu0 0.0
    %1159 = vmatpush1.msra.mxu0 0.0
    %1160 = vmatprep.subr.mxu0 0.0
    %1161 = vmatpush1.msra.mxu0 0.0
    %1162 = vmatprep.subr.mxu0 0.0
    %1163 = vmatpush1.msra.mxu0 0.0
    %1164 = vmatprep.subr.mxu0 0.0
    %1165 = vmatpush1.msra.mxu0 0.0
    %1166 = vmatprep.subr.mxu0 0.0
    %1167 = vmatpush1.msra.mxu0 0.0
    %1168 = vmatprep.subr.mxu0 0.0
    %1169 = vmatpush1.msra.mxu0 0.0
    %1170 = vmatprep.subr.mxu0 0.0
    %1171 = vmatpush1.msra.mxu0 0.0
    %1172 = vmatprep.subr.mxu0 0.0
    %1173 = vmatpush1.msra.mxu0 0.0
    %1174 = vmatprep.subr.mxu0 0.0
    %1175 = vmatpush1.msra.mxu0 0.0
    %1176 = vmatprep.subr.mxu0 0.0
    %1177 = vmatpush1.msra.mxu0 0.0
    %1178 = vmatprep.subr.mxu0 0.0
    %1179 = vmatpush1.msra.mxu0 0.0
    %1180 = vmatprep.subr.mxu0 0.0
    %1181 = vmatpush1.msra.mxu0 0.0
    %1182 = vmatprep.subr.mxu0 0.0
    %1183 = vmatpush1.msra.mxu0 0.0
    %1184 = vmatprep.subr.mxu0 0.0
    %1185 = vmatpush1.msra.mxu0 0.0
    %1186 = vmatprep.subr.mxu0 0.0
    %1187 = vmatpush1.msra.mxu0 0.0
    %1188 = vmatprep.subr.mxu0 0.0
    %1189 = vmatpush1.msra.mxu0 0.0
    %1190 = vmatprep.mubr.f32.mxu0 0.0
    %1191 = vmatmul.mubr.f32.gmra.mrb[0].mxu0 %v1122
    %v1192 = vpop.f32.mrb[0].mxu0
    %v1193 = vadd.f32 0.0, %v1192
    %v1194 = vpop.f32.mrb[0].mxu0
    %1195 = vdwg.mxu0
    %v1196 = vadd.f32 %v1125, %v1193
    %v1197 = vtanh.pop %v1196
    %1198 = vst [vmem:[#allocation2 + $0x38] sm:$0xff] %v1197
    %v1199 = vld [vmem:[#allocation2] sm:$0xff]
    %v1200 = vld [vmem:[#allocation2 + $0x8] sm:$0xff]
    %v1201 = vld [vmem:[#allocation2 + $0x10] sm:$0xff]
    %v1202 = vld [vmem:[#allocation2 + $0x18] sm:$0xff]
    %v1203 = vld [vmem:[#allocation2 + $0x20] sm:$0xff]
    %v1204 = vld [vmem:[#allocation2 + $0x28] sm:$0xff]
    %v1205 = vld [vmem:[#allocation2 + $0x30] sm:$0xff]
    %v1206 = vld [vmem:[#allocation2 + $0x38] sm:$0xff]
    %v1207 = vld [vmem:[#allocation14] sm:$0xff]
    %v1208 = vld [vmem:[#allocation14 + $0x8] sm:$0xff]
    %v1209 = vld [vmem:[#allocation14 + $0x10] sm:$0xff]
    %v1210 = vld [vmem:[#allocation14 + $0x18] sm:$0xff]
    %v1211 = vld [vmem:[#allocation14 + $0x20] sm:$0xff]
    %v1212 = vld [vmem:[#allocation14 + $0x28] sm:$0xff]
    %v1213 = vld [vmem:[#allocation14 + $0x30] sm:$0xff]
    %v1214 = vld [vmem:[#allocation14 + $0x38] sm:$0xff]
    %v1215 = vld [vmem:[#allocation14 + $0x40] sm:$0xff]
    %v1216 = vld [vmem:[#allocation14 + $0x48] sm:$0xff]
    %v1217 = vld [vmem:[#allocation14 + $0x50] sm:$0xff]
    %v1218 = vld [vmem:[#allocation14 + $0x58] sm:$0xff]
    %v1219 = vld [vmem:[#allocation14 + $0x60] sm:$0xff]
    %v1220 = vld [vmem:[#allocation14 + $0x68] sm:$0xff]
    %v1221 = vld [vmem:[#allocation14 + $0x70] sm:$0xff]
    %v1222 = vld [vmem:[#allocation14 + $0x78] sm:$0xff]
    %v1223 = vld [vmem:[%s9] sm:$0x1]
    %v1225 = vlaneseq
    %v1226 = vshrl.u32 %v1225, 7
    %v1227 = vsub.s32 0, %v1226
    %v1228 = vrot.slane %v1223, %v1227
    %1230 = vmatprep.subr.mxu0 0.0
    %1231 = vmatpush1.msra.mxu0 %v1207
    %1232 = vmatprep.subr.mxu0 0.0
    %1233 = vmatpush1.msra.mxu0 %v1208
    %1234 = vmatprep.subr.mxu0 0.0
    %1235 = vmatpush1.msra.mxu0 %v1209
    %1236 = vmatprep.subr.mxu0 0.0
    %1237 = vmatpush1.msra.mxu0 %v1210
    %1238 = vmatprep.subr.mxu0 0.0
    %1239 = vmatpush1.msra.mxu0 %v1211
    %1240 = vmatprep.subr.mxu0 0.0
    %1241 = vmatpush1.msra.mxu0 %v1212
    %1242 = vmatprep.subr.mxu0 0.0
    %1243 = vmatpush1.msra.mxu0 %v1213
    %1244 = vmatprep.subr.mxu0 0.0
    %1245 = vmatpush1.msra.mxu0 %v1214
    %1246 = vmatprep.subr.mxu0 0.0
    %1247 = vmatpush1.msra.mxu0 %v1215
    %1248 = vmatprep.subr.mxu0 0.0
    %1249 = vmatpush1.msra.mxu0 %v1216
    %1250 = vmatprep.subr.mxu0 0.0
    %1251 = vmatpush1.msra.mxu0 %v1217
    %1252 = vmatprep.subr.mxu0 0.0
    %1253 = vmatpush1.msra.mxu0 %v1218
    %1254 = vmatprep.subr.mxu0 0.0
    %1255 = vmatpush1.msra.mxu0 %v1219
    %1256 = vmatprep.subr.mxu0 0.0
    %1257 = vmatpush1.msra.mxu0 %v1220
    %1258 = vmatprep.subr.mxu0 0.0
    %1259 = vmatpush1.msra.mxu0 %v1221
    %1260 = vmatprep.subr.mxu0 0.0
    %1261 = vmatpush1.msra.mxu0 %v1222
    %1262 = vmatprep.subr.mxu0 0.0
    %1263 = vmatpush1.msra.mxu0 0.0
    %1264 = vmatprep.subr.mxu0 0.0
    %1265 = vmatpush1.msra.mxu0 0.0
    %1266 = vmatprep.subr.mxu0 0.0
    %1267 = vmatpush1.msra.mxu0 0.0
    %1268 = vmatprep.subr.mxu0 0.0
    %1269 = vmatpush1.msra.mxu0 0.0
    %1270 = vmatprep.subr.mxu0 0.0
    %1271 = vmatpush1.msra.mxu0 0.0
    %1272 = vmatprep.subr.mxu0 0.0
    %1273 = vmatpush1.msra.mxu0 0.0
    %1274 = vmatprep.subr.mxu0 0.0
    %1275 = vmatpush1.msra.mxu0 0.0
    %1276 = vmatprep.subr.mxu0 0.0
    %1277 = vmatpush1.msra.mxu0 0.0
    %1278 = vmatprep.subr.mxu0 0.0
    %1279 = vmatpush1.msra.mxu0 0.0
    %1280 = vmatprep.subr.mxu0 0.0
    %1281 = vmatpush1.msra.mxu0 0.0
    %1282 = vmatprep.subr.mxu0 0.0
    %1283 = vmatpush1.msra.mxu0 0.0
    %1284 = vmatprep.subr.mxu0 0.0
    %1285 = vmatpush1.msra.mxu0 0.0
    %1286 = vmatprep.subr.mxu0 0.0
    %1287 = vmatpush1.msra.mxu0 0.0
    %1288 = vmatprep.subr.mxu0 0.0
    %1289 = vmatpush1.msra.mxu0 0.0
    %1290 = vmatprep.subr.mxu0 0.0
    %1291 = vmatpush1.msra.mxu0 0.0
    %1292 = vmatprep.subr.mxu0 0.0
    %1293 = vmatpush1.msra.mxu0 0.0
    %1294 = vmatprep.mubr.f32.mxu0 0.0
    %1295 = vmatmul.mubr.f32.gmra.mrb[0].mxu0 %v1199
    %v1296 = vpop.f32.mrb[0].mxu0
    %v1297 = vadd.f32 %v1228, %v1296
    %v1298 = vpop.f32.mrb[0].mxu0
    %1299 = vmatprep.mubr.f32.mxu0 0.0
    %1300 = vmatmul.mubr.f32.gmra.mrb[0].mxu0 %v1200
    %v1301 = vpop.f32.mrb[0].mxu0
    %v1302 = vadd.f32 %v1228, %v1301
    %v1303 = vpop.f32.mrb[0].mxu0
    %1304 = vmatprep.mubr.f32.mxu0 0.0
    %1305 = vmatmul.mubr.f32.gmra.mrb[0].mxu0 %v1201
    %v1306 = vpop.f32.mrb[0].mxu0
    %v1307 = vadd.f32 %v1228, %v1306
    %v1308 = vpop.f32.mrb[0].mxu0
    %1309 = vmatprep.mubr.f32.mxu0 0.0
    %1310 = vmatmul.mubr.f32.gmra.mrb[0].mxu0 %v1202
    %v1311 = vpop.f32.mrb[0].mxu0
    %v1312 = vadd.f32 %v1228, %v1311
    %v1313 = vpop.f32.mrb[0].mxu0
    %1314 = vmatprep.mubr.f32.mxu0 0.0
    %1315 = vmatmul.mubr.f32.gmra.mrb[0].mxu0 %v1203
    %v1316 = vpop.f32.mrb[0].mxu0
    %v1317 = vadd.f32 %v1228, %v1316
    %v1318 = vpop.f32.mrb[0].mxu0
    %1319 = vmatprep.mubr.f32.mxu0 0.0
    %1320 = vmatmul.mubr.f32.gmra.mrb[0].mxu0 %v1204
    %v1321 = vpop.f32.mrb[0].mxu0
    %v1322 = vadd.f32 %v1228, %v1321
    %v1323 = vpop.f32.mrb[0].mxu0
    %1324 = vmatprep.mubr.f32.mxu0 0.0
    %1325 = vmatmul.mubr.f32.gmra.mrb[0].mxu0 %v1205
    %v1326 = vpop.f32.mrb[0].mxu0
    %v1327 = vadd.f32 %v1228, %v1326
    %v1328 = vpop.f32.mrb[0].mxu0
    %1329 = vmatprep.mubr.f32.mxu0 0.0
    %1330 = vmatmul.mubr.f32.gmra.mrb[0].mxu0 %v1206
    %v1331 = vpop.f32.mrb[0].mxu0
    %v1332 = vadd.f32 %v1228, %v1331
    %v1333 = vpop.f32.mrb[0].mxu0
    %1334 = vdwg.mxu0
    %1335 = vst [vmem:[#allocation15] sm:$0xff] %v1297
    %1336 = vst [vmem:[#allocation15 + $0x8] sm:$0xff] %v1302
    %1337 = vst [vmem:[#allocation15 + $0x10] sm:$0xff] %v1307
    %1338 = vst [vmem:[#allocation15 + $0x18] sm:$0xff] %v1312
    %1339 = vst [vmem:[#allocation15 + $0x20] sm:$0xff] %v1317
    %1340 = vst [vmem:[#allocation15 + $0x28] sm:$0xff] %v1322
    %1341 = vst [vmem:[#allocation15 + $0x30] sm:$0xff] %v1327
    %1342 = vst [vmem:[#allocation15 + $0x38] sm:$0xff] %v1332
    %1343 = vst [vmem:[#allocation16] sm:$0xff] %v1197
    // Predicated region
    $region70: #{tpu_custom_call.1} parent=1 // pred_check
      _
    $region71: #{tpu_custom_call.1} parent=1 // pred_check_branch
      %1345 = sbr.rel (0) target = $region73
    $region72: #{tpu_custom_call.1} parent=1 // pred_region
      %s1347 = ssub.s32 1024, 1024
      %1348 = vsyncadd [#allocation5], %s1347
      %s1350 = sshll.u32 [#allocation15], 4
      %s1351 = int_to_ptr.vmem [resolvable:$true] %s1350
      %1353 = dma.vmem_to_hbm [thread:$0]  %s1351, 1024, %s10, [#allocation5]
    $region73: #{tpu_custom_call.1} parent=1 // pred_fallthru
      _
    // Predicated region
    $region74: #{tpu_custom_call.1} parent=1 // pred_check
      _
    $region75: #{tpu_custom_call.1} parent=1 // pred_check_branch
      %1355 = sbr.rel (0) target = $region77
    $region76: #{tpu_custom_call.1} parent=1 // pred_region
      %s1357 = ssub.s32 128, 128
      %1358 = vsyncadd [#allocation17], %s1357
      %s1360 = sshll.u32 [#allocation16], 4
      %s1361 = int_to_ptr.vmem [resolvable:$true] %s1360
      %1363 = dma.vmem_to_hbm [thread:$0]  %s1361, 128, %s11, [#allocation17]
    $region77: #{tpu_custom_call.1} parent=1 // pred_fallthru
      _
    // Predicated region
    $region78: #{tpu_custom_call.1} parent=1 // pred_check
      _
    $region79: #{tpu_custom_call.1} parent=1 // pred_check_branch
      %1365 = sbr.rel (0) target = $region81
    $region80: #{tpu_custom_call.1} parent=1 // pred_region
      %1366 = dma.done [#allocation5], 1024
    $region81: #{tpu_custom_call.1} parent=1 // pred_fallthru
      _
    // Predicated region
    $region82: #{tpu_custom_call.1} parent=1 // pred_check
      _
    $region83: #{tpu_custom_call.1} parent=1 // pred_check_branch
      %1368 = sbr.rel (0) target = $region85
    $region84: #{tpu_custom_call.1} parent=1 // pred_region
      %1369 = dma.done [#allocation17], 128
    $region85: #{tpu_custom_call.1} parent=1 // pred_fallthru
      _
    %1370 = vsyncpa [#allocation4], 1
    %1371 = vsyncpa [#allocation7], 1
    %1372 = vsyncpa [#allocation10], 1
    %1373 = vsyncpa [#allocation13], 1
    %1374 = vsyncpa [#allocation5], 1
    %1375 = vsyncpa [#allocation17], 1

</llo_original>
